<compile_context>
chip_gen: v7x
topology: tpu7x:2x2x1
jax: 0.10.0
libtpu: 0.0.40
codegen_flags: <defaults>
</compile_context>

<pallas_src>
import numpy as np
import jax
import jax.numpy as jnp
from jax.experimental import pallas as pl
from jax.experimental.pallas import tpu as pltpu


def decoder_kernel(emb_ref,      # (T*B, E)   time-major, batch-padded embeddings
                   h0_ref,       # (B, H)
                   c0_ref,       # (B, H)
                   w_ih_ref,     # (E, 4H)
                   w_hh_ref,     # (H, 4H)
                   b_gate_ref,   # (1, 4H)    bias_ih + bias_hh
                   w_fc_ref,     # (H, Vp)    fc weight, vocab padded to 128 lanes
                   b_fc_ref,     # (1, Vp)
                   pred_ref,     # (T*B, Vp)  output slab (lane-dense)
                   xw_ref,       # scratch (T*B, 4H)
                   hs_ref):      # scratch (T*B, H)
    TB, _ = emb_ref.shape
    B, H = h0_ref.shape
    T = TB // B

    # ---- hoisted off the serial chain: x-projection for ALL steps, bias folded in ----
    xw_ref[...] = (jnp.dot(emb_ref[...], w_ih_ref[...],
                           preferred_element_type=jnp.float32)
                   + b_gate_ref[...])                              # (T*B, 4H)

    w_hh = w_hh_ref[...]                                           # hoisted weight load

    def step(t, carry):
        h, c = carry
        row = pl.multiple_of(t * B, B)                             # sublane-aligned
        gates = xw_ref[pl.ds(row, B), :] + jnp.dot(
            h, w_hh, preferred_element_type=jnp.float32)           # (B, 4H)

        # sigmoid once on the full 4H vreg; tanh only on the g slice (PyTorch i,f,g,o).
        sig = jax.nn.sigmoid(gates)
        i_g = sig[:, 0 * H:1 * H]
        f_g = sig[:, 1 * H:2 * H]
        o_g = sig[:, 3 * H:4 * H]
        g_g = jnp.tanh(gates[:, 2 * H:3 * H])

        c_new = f_g * c + i_g * g_g
        h_new = o_g * jnp.tanh(c_new)

        hs_ref[pl.ds(row, B), :] = h_new                           # defer fc head
        return h_new, c_new

    jax.lax.fori_loop(0, T, step, (h0_ref[...], c0_ref[...]),
                      unroll=min(T, 8))

    # ---- deferred fc head: one big matmul, bias added once, dense lane-full store ----
    pred_ref[...] = (jnp.dot(hs_ref[...], w_fc_ref[...],
                             preferred_element_type=jnp.float32)
                     + b_fc_ref[...])


def decoder_forward(encoder_out, encoded_captions, caption_lengths, params):
    """Mirrors Decoder.forward.  Returns (predictions, encoded_captions_sorted,
    decode_lengths, sort_ind)."""
    B = encoder_out.shape[0]
    De = encoder_out.shape[-1]
    encoder_out = encoder_out.reshape(B, -1, De)

    # ---- glue: sort by caption length (descending), embedding lookup ----
    cap_len = np.asarray(caption_lengths).reshape(B)
    sort_ind = np.argsort(-cap_len, kind="stable")
    cap_len_sorted = cap_len[sort_ind]
    decode_lengths = (cap_len_sorted - 1).tolist()
    T_max = int(max(decode_lengths))

    enc_sorted = encoder_out[jnp.asarray(sort_ind)]                    # (B, S, De)
    caps_sorted = encoded_captions[jnp.asarray(sort_ind)]              # (B, Tc)
    emb = jnp.take(params["emb_w"], caps_sorted, axis=0)               # (B, Tc, E)

    E = params["emb_w"].shape[1]
    H = params["w_hh_t"].shape[0]
    V = params["w_fc_t"].shape[1]
    Vp = ((V + 127) // 128) * 128                                      # lane-dense vocab pad

    # ---- hoisted init hidden state (one-shot tiny matmuls; stays in XLA) ----
    mean_enc = jnp.mean(enc_sorted, axis=1)                            # (B, De)
    h0 = mean_enc @ params["w_h0_t"] + params["b_h0"]                  # (B, H)
    c0 = mean_enc @ params["w_c0_t"] + params["b_c0"]                  # (B, H)

    # ---- pad batch to a full sublane group (multiple of 8) ----
    B_pad = max(8, ((B + 7) // 8) * 8)
    pad = B_pad - B

    emb_t = jnp.transpose(emb[:, :T_max, :], (1, 0, 2))                # (T, B, E)
    emb_t = jnp.pad(emb_t, ((0, 0), (0, pad), (0, 0)))                 # (T, B_pad, E)
    emb_flat = emb_t.reshape(T_max * B_pad, E)                         # (T*B_pad, E)
    h0p = jnp.pad(h0, ((0, pad), (0, 0)))                              # (B_pad, H)
    c0p = jnp.pad(c0, ((0, pad), (0, 0)))                              # (B_pad, H)

    # fc weights padded to a full 128-lane vocab (zero columns -> unmasked dense stores)
    w_fc_pad = jnp.pad(params["w_fc_t"], ((0, 0), (0, Vp - V)))        # (H, Vp)
    b_fc_pad = jnp.pad(params["b_fc"], ((0, 0), (0, Vp - V)))          # (1, Vp)

    preds_flat = pl.pallas_call(
        decoder_kernel,
        out_shape=jax.ShapeDtypeStruct((T_max * B_pad, Vp), jnp.float32),
        in_specs=[
            pl.BlockSpec((T_max * B_pad, E), lambda: (0, 0)),    # embeddings (flat, time-major)
            pl.BlockSpec((B_pad, H), lambda: (0, 0)),            # h0
            pl.BlockSpec((B_pad, H), lambda: (0, 0)),            # c0
            pl.BlockSpec((E, 4 * H), lambda: (0, 0)),            # W_ih^T
            pl.BlockSpec((H, 4 * H), lambda: (0, 0)),            # W_hh^T
            pl.BlockSpec((1, 4 * H), lambda: (0, 0)),            # fused gate bias
            pl.BlockSpec((H, Vp), lambda: (0, 0)),               # fc W^T (vocab-padded)
            pl.BlockSpec((1, Vp), lambda: (0, 0)),               # fc bias (vocab-padded)
        ],
        out_specs=pl.BlockSpec((T_max * B_pad, Vp), lambda: (0, 0)),
        scratch_shapes=[
            pltpu.VMEM((T_max * B_pad, 4 * H), jnp.float32),     # precomputed x-projection
            pltpu.VMEM((T_max * B_pad, H), jnp.float32),         # per-step hidden states
        ],
        compiler_params=pltpu.CompilerParams(
            vmem_limit_bytes=32 * 1024 * 1024),
    )(emb_flat, h0p, c0p, params["w_ih_t"], params["w_hh_t"], params["b_lstm"],
      w_fc_pad, b_fc_pad)

    # (T*B_pad, Vp) -> (B, T, V), then apply the active-prefix mask once (fused XLA ops).
    preds = preds_flat[:, :V].reshape(T_max, B_pad, V)[:, :B, :]       # (T, B, V)
    predictions = jnp.transpose(preds, (1, 0, 2))                      # (B, T, V)
    dec_len = jnp.asarray(decode_lengths, dtype=jnp.int32)             # (B,)
    mask = (jnp.arange(T_max, dtype=jnp.int32)[None, :]
            < dec_len[:, None]).astype(jnp.float32)[:, :, None]        # (B, T, 1)
    predictions = predictions * mask

    return predictions, caps_sorted, decode_lengths, sort_ind


# ------------------------- pure-JAX reference (for validation) -------------------------
def decoder_reference(enc_sorted, emb_sorted, decode_lengths, params):
    mean_enc = jnp.mean(enc_sorted, axis=1)
    h = mean_enc @ params["w_h0_t"] + params["b_h0"]
    c = mean_enc @ params["w_c0_t"] + params["b_c0"]
    H = h.shape[-1]
    T_max = int(max(decode_lengths))
    lens = jnp.asarray(decode_lengths)
    preds = []
    for t in range(T_max):
        x = emb_sorted[:, t, :]
        gates = x @ params["w_ih_t"] + h @ params["w_hh_t"] + params["b_lstm"]
        i_g = jax.nn.sigmoid(gates[:, 0 * H:1 * H])
        f_g = jax.nn.sigmoid(gates[:, 1 * H:2 * H])
        g_g = jnp.tanh(gates[:, 2 * H:3 * H])
        o_g = jax.nn.sigmoid(gates[:, 3 * H:4 * H])
        c = f_g * c + i_g * g_g
        h = o_g * jnp.tanh(c)
        p = h @ params["w_fc_t"] + params["b_fc"]
        mask = (lens > t).astype(p.dtype)[:, None]
        preds.append(p * mask)
    return jnp.stack(preds, axis=1)


if __name__ == "__main__":
    # --- problem sizes (small, consistent with Decoder.__init__ / forward) ---
    B = 4            # batch
    S = 6            # encoder positions (after .view(B, -1, De))
    De = 24          # encoder_dim
    E = 32           # embed_dim
    H = 32           # decoder_dim
    V = 16           # vocab size
    Tc = 9           # caption length (tokens)

    key = jax.random.PRNGKey(0)
    keys = jax.random.split(key, 12)

    # deterministic "pretrained" embedding + module params
    params = {
        "emb_w":  jax.random.normal(keys[0], (V, E), jnp.float32),
        "w_ih_t": jnp.transpose(jax.random.uniform(keys[1], (4 * H, E), jnp.float32, -0.2, 0.2)),
        "w_hh_t": jnp.transpose(jax.random.uniform(keys[2], (4 * H, H), jnp.float32, -0.2, 0.2)),
        "b_lstm": (jax.random.uniform(keys[3], (1, 4 * H), jnp.float32, -0.2, 0.2)
                   + jax.random.uniform(keys[4], (1, 4 * H), jnp.float32, -0.2, 0.2)),
        "w_h0_t": jnp.transpose(jax.random.uniform(keys[5], (H, De), jnp.float32, -0.2, 0.2)),
        "b_h0":   jax.random.uniform(keys[6], (1, H), jnp.float32, -0.2, 0.2),
        "w_c0_t": jnp.transpose(jax.random.uniform(keys[7], (H, De), jnp.float32, -0.2, 0.2)),
        "b_c0":   jax.random.uniform(keys[8], (1, H), jnp.float32, -0.2, 0.2),
        "w_fc_t": jnp.transpose(jax.random.uniform(keys[9], (V, H), jnp.float32, -0.1, 0.1)),
        "b_fc":   jnp.zeros((1, V), jnp.float32),   # fc.bias.data.fill_(0)
    }

    # deterministic example inputs
    encoder_out = jax.random.normal(keys[10], (B, S, De), jnp.float32)
    encoded_captions = jax.random.randint(keys[11], (B, Tc), 0, V, jnp.int32)
    caption_lengths = jnp.array([[5], [9], [3], [7]], dtype=jnp.int32)

    predictions, caps_sorted, decode_lengths, sort_ind = decoder_forward(
        encoder_out, encoded_captions, caption_lengths, params)
    predictions = jax.block_until_ready(predictions)

    # validate against pure-JAX reference
    enc_sorted = encoder_out[jnp.asarray(sort_ind)]
    emb_sorted = jnp.take(params["emb_w"], caps_sorted, axis=0)
    ref = decoder_reference(enc_sorted, emb_sorted, decode_lengths, params)
    np.testing.assert_allclose(np.asarray(predictions), np.asarray(ref),
                               rtol=1e-5, atol=1e-5)

    print("KERNEL_OK")
</pallas_src>

<mosaic_0001>
module attributes {stable_mosaic.version = 11 : i64} {
  func.func @decoder_kernel(%arg0: memref<64x32xf32, #tpu.memory_space<vmem>>, %arg1: memref<8x32xf32, #tpu.memory_space<vmem>>, %arg2: memref<8x32xf32, #tpu.memory_space<vmem>>, %arg3: memref<32x128xf32, #tpu.memory_space<vmem>>, %arg4: memref<32x128xf32, #tpu.memory_space<vmem>>, %arg5: memref<1x128xf32, #tpu.memory_space<vmem>>, %arg6: memref<32x128xf32, #tpu.memory_space<vmem>>, %arg7: memref<1x128xf32, #tpu.memory_space<vmem>>, %arg8: memref<64x128xf32, #tpu.memory_space<vmem>>, %arg9: memref<64x128xf32, #tpu.memory_space<vmem>>, %arg10: memref<64x32xf32, #tpu.memory_space<vmem>>) attributes {dimension_semantics = [], scalar_prefetch = 0 : i64, scratch_operands = 2 : i64, tpu.core_type = #tpu.core_type<tc>} {
    %c0 = arith.constant 0 : index
    %c0_0 = arith.constant 0 : index
    %0 = vector.load %arg0[%c0, %c0_0] : memref<64x32xf32, #tpu.memory_space<vmem>>, vector<64x32xf32>
    %c0_1 = arith.constant 0 : index
    %c0_2 = arith.constant 0 : index
    %1 = vector.load %arg3[%c0_1, %c0_2] : memref<32x128xf32, #tpu.memory_space<vmem>>, vector<32x128xf32>
    %cst = arith.constant dense<0.000000e+00> : vector<64x128xf32>
    %2 = tpu.matmul %0, %1, %cst {dimension_numbers = #tpu.dot_dimension_numbers<[1], [0], [0], [1], [0, 0, 1, 1], [], []>} : vector<64x32xf32>, vector<32x128xf32>, vector<64x128xf32> -> vector<64x128xf32>
    %c0_3 = arith.constant 0 : index
    %c0_4 = arith.constant 0 : index
    %3 = vector.load %arg5[%c0_3, %c0_4] : memref<1x128xf32, #tpu.memory_space<vmem>>, vector<1x128xf32>
    %4 = vector.broadcast %3 : vector<1x128xf32> to vector<64x128xf32>
    %5 = arith.addf %2, %4 : vector<64x128xf32>
    %c0_5 = arith.constant 0 : index
    %c0_6 = arith.constant 0 : index
    %6 = vector.load %arg9[%c0_5, %c0_6] : memref<64x128xf32, #tpu.memory_space<vmem>>, vector<64x128xf32>
    tpu.vector_store %arg9[%c0_5, %c0_6], %5 {strides = array<i32>} : memref<64x128xf32, #tpu.memory_space<vmem>>, vector<64x128xf32>,
    %c0_7 = arith.constant 0 : index
    %c0_8 = arith.constant 0 : index
    %7 = vector.load %arg4[%c0_7, %c0_8] : memref<32x128xf32, #tpu.memory_space<vmem>>, vector<32x128xf32>
    %c0_9 = arith.constant 0 : index
    %c0_10 = arith.constant 0 : index
    %8 = vector.load %arg1[%c0_9, %c0_10] : memref<8x32xf32, #tpu.memory_space<vmem>>, vector<8x32xf32>
    %c0_11 = arith.constant 0 : index
    %c0_12 = arith.constant 0 : index
    %9 = vector.load %arg2[%c0_11, %c0_12] : memref<8x32xf32, #tpu.memory_space<vmem>>, vector<8x32xf32>
    %c0_i32 = arith.constant 0 : i32
    %c8_i32 = arith.constant 8 : i32
    %10 = arith.muli %c0_i32, %c8_i32 : i32
    %11 = tpu.assume_multiple %10, 8 : i32
    %12 = arith.index_cast %11 : i32 to index
    %c0_13 = arith.constant 0 : index
    %13 = vector.load %arg9[%12, %c0_13] : memref<64x128xf32, #tpu.memory_space<vmem>>, vector<8x128xf32>
    %cst_14 = arith.constant dense<0.000000e+00> : vector<8x128xf32>
    %14 = tpu.matmul %8, %7, %cst_14 {dimension_numbers = #tpu.dot_dimension_numbers<[1], [0], [0], [1], [0, 0, 1, 1], [], []>} : vector<8x32xf32>, vector<32x128xf32>, vector<8x128xf32> -> vector<8x128xf32>
    %15 = arith.addf %13, %14 : vector<8x128xf32>
    %16 = arith.negf %15 : vector<8x128xf32>
    %17 = math.exp %16 : vector<8x128xf32>
    %cst_15 = arith.constant 1.000000e+00 : f32
    %18 = vector.broadcast %cst_15 : f32 to vector<8x128xf32>
    %19 = arith.addf %18, %17 : vector<8x128xf32>
    %20 = arith.divf %18, %19 : vector<8x128xf32>
    %21 = vector.extract_strided_slice %20 {offsets = [0, 0], sizes = [8, 32], strides = [1, 1]} : vector<8x128xf32> to vector<8x32xf32>
    %22 = vector.extract_strided_slice %20 {offsets = [0, 32], sizes = [8, 32], strides = [1, 1]} : vector<8x128xf32> to vector<8x32xf32>
    %23 = vector.extract_strided_slice %20 {offsets = [0, 96], sizes = [8, 32], strides = [1, 1]} : vector<8x128xf32> to vector<8x32xf32>
    %24 = vector.extract_strided_slice %15 {offsets = [0, 64], sizes = [8, 32], strides = [1, 1]} : vector<8x128xf32> to vector<8x32xf32>
    %25 = math.tanh %24 : vector<8x32xf32>
    %26 = arith.mulf %22, %9 : vector<8x32xf32>
    %27 = arith.mulf %21, %25 : vector<8x32xf32>
    %28 = arith.addf %26, %27 : vector<8x32xf32>
    %29 = math.tanh %28 : vector<8x32xf32>
    %30 = arith.mulf %23, %29 : vector<8x32xf32>
    %31 = arith.index_cast %11 : i32 to index
    %c0_16 = arith.constant 0 : index
    %32 = vector.load %arg10[%31, %c0_16] : memref<64x32xf32, #tpu.memory_space<vmem>>, vector<8x32xf32>
    tpu.vector_store %arg10[%31, %c0_16], %30 {strides = array<i32>} : memref<64x32xf32, #tpu.memory_space<vmem>>, vector<8x32xf32>,
    %c1_i32 = arith.constant 1 : i32
    %c8_i32_17 = arith.constant 8 : i32
    %33 = arith.muli %c1_i32, %c8_i32_17 : i32
    %34 = tpu.assume_multiple %33, 8 : i32
    %35 = arith.index_cast %34 : i32 to index
    %c0_18 = arith.constant 0 : index
    %36 = vector.load %arg9[%35, %c0_18] : memref<64x128xf32, #tpu.memory_space<vmem>>, vector<8x128xf32>
    %cst_19 = arith.constant dense<0.000000e+00> : vector<8x128xf32>
    %37 = tpu.matmul %30, %7, %cst_19 {dimension_numbers = #tpu.dot_dimension_numbers<[1], [0], [0], [1], [0, 0, 1, 1], [], []>} : vector<8x32xf32>, vector<32x128xf32>, vector<8x128xf32> -> vector<8x128xf32>
    %38 = arith.addf %36, %37 : vector<8x128xf32>
    %39 = arith.negf %38 : vector<8x128xf32>
    %40 = math.exp %39 : vector<8x128xf32>
    %cst_20 = arith.constant 1.000000e+00 : f32
    %41 = vector.broadcast %cst_20 : f32 to vector<8x128xf32>
    %42 = arith.addf %41, %40 : vector<8x128xf32>
    %43 = arith.divf %41, %42 : vector<8x128xf32>
    %44 = vector.extract_strided_slice %43 {offsets = [0, 0], sizes = [8, 32], strides = [1, 1]} : vector<8x128xf32> to vector<8x32xf32>
    %45 = vector.extract_strided_slice %43 {offsets = [0, 32], sizes = [8, 32], strides = [1, 1]} : vector<8x128xf32> to vector<8x32xf32>
    %46 = vector.extract_strided_slice %43 {offsets = [0, 96], sizes = [8, 32], strides = [1, 1]} : vector<8x128xf32> to vector<8x32xf32>
    %47 = vector.extract_strided_slice %38 {offsets = [0, 64], sizes = [8, 32], strides = [1, 1]} : vector<8x128xf32> to vector<8x32xf32>
    %48 = math.tanh %47 : vector<8x32xf32>
    %49 = arith.mulf %45, %28 : vector<8x32xf32>
    %50 = arith.mulf %44, %48 : vector<8x32xf32>
    %51 = arith.addf %49, %50 : vector<8x32xf32>
    %52 = math.tanh %51 : vector<8x32xf32>
    %53 = arith.mulf %46, %52 : vector<8x32xf32>
    %54 = arith.index_cast %34 : i32 to index
    %c0_21 = arith.constant 0 : index
    %55 = vector.load %arg10[%54, %c0_21] : memref<64x32xf32, #tpu.memory_space<vmem>>, vector<8x32xf32>
    tpu.vector_store %arg10[%54, %c0_21], %53 {strides = array<i32>} : memref<64x32xf32, #tpu.memory_space<vmem>>, vector<8x32xf32>,
    %c2_i32 = arith.constant 2 : i32
    %c8_i32_22 = arith.constant 8 : i32
    %56 = arith.muli %c2_i32, %c8_i32_22 : i32
    %57 = tpu.assume_multiple %56, 8 : i32
    %58 = arith.index_cast %57 : i32 to index
    %c0_23 = arith.constant 0 : index
    %59 = vector.load %arg9[%58, %c0_23] : memref<64x128xf32, #tpu.memory_space<vmem>>, vector<8x128xf32>
    %cst_24 = arith.constant dense<0.000000e+00> : vector<8x128xf32>
    %60 = tpu.matmul %53, %7, %cst_24 {dimension_numbers = #tpu.dot_dimension_numbers<[1], [0], [0], [1], [0, 0, 1, 1], [], []>} : vector<8x32xf32>, vector<32x128xf32>, vector<8x128xf32> -> vector<8x128xf32>
    %61 = arith.addf %59, %60 : vector<8x128xf32>
    %62 = arith.negf %61 : vector<8x128xf32>
    %63 = math.exp %62 : vector<8x128xf32>
    %cst_25 = arith.constant 1.000000e+00 : f32
    %64 = vector.broadcast %cst_25 : f32 to vector<8x128xf32>
    %65 = arith.addf %64, %63 : vector<8x128xf32>
    %66 = arith.divf %64, %65 : vector<8x128xf32>
    %67 = vector.extract_strided_slice %66 {offsets = [0, 0], sizes = [8, 32], strides = [1, 1]} : vector<8x128xf32> to vector<8x32xf32>
    %68 = vector.extract_strided_slice %66 {offsets = [0, 32], sizes = [8, 32], strides = [1, 1]} : vector<8x128xf32> to vector<8x32xf32>
    %69 = vector.extract_strided_slice %66 {offsets = [0, 96], sizes = [8, 32], strides = [1, 1]} : vector<8x128xf32> to vector<8x32xf32>
    %70 = vector.extract_strided_slice %61 {offsets = [0, 64], sizes = [8, 32], strides = [1, 1]} : vector<8x128xf32> to vector<8x32xf32>
    %71 = math.tanh %70 : vector<8x32xf32>
    %72 = arith.mulf %68, %51 : vector<8x32xf32>
    %73 = arith.mulf %67, %71 : vector<8x32xf32>
    %74 = arith.addf %72, %73 : vector<8x32xf32>
    %75 = math.tanh %74 : vector<8x32xf32>
    %76 = arith.mulf %69, %75 : vector<8x32xf32>
    %77 = arith.index_cast %57 : i32 to index
    %c0_26 = arith.constant 0 : index
    %78 = vector.load %arg10[%77, %c0_26] : memref<64x32xf32, #tpu.memory_space<vmem>>, vector<8x32xf32>
    tpu.vector_store %arg10[%77, %c0_26], %76 {strides = array<i32>} : memref<64x32xf32, #tpu.memory_space<vmem>>, vector<8x32xf32>,
    %c3_i32 = arith.constant 3 : i32
    %c8_i32_27 = arith.constant 8 : i32
    %79 = arith.muli %c3_i32, %c8_i32_27 : i32
    %80 = tpu.assume_multiple %79, 8 : i32
    %81 = arith.index_cast %80 : i32 to index
    %c0_28 = arith.constant 0 : index
    %82 = vector.load %arg9[%81, %c0_28] : memref<64x128xf32, #tpu.memory_space<vmem>>, vector<8x128xf32>
    %cst_29 = arith.constant dense<0.000000e+00> : vector<8x128xf32>
    %83 = tpu.matmul %76, %7, %cst_29 {dimension_numbers = #tpu.dot_dimension_numbers<[1], [0], [0], [1], [0, 0, 1, 1], [], []>} : vector<8x32xf32>, vector<32x128xf32>, vector<8x128xf32> -> vector<8x128xf32>
    %84 = arith.addf %82, %83 : vector<8x128xf32>
    %85 = arith.negf %84 : vector<8x128xf32>
    %86 = math.exp %85 : vector<8x128xf32>
    %cst_30 = arith.constant 1.000000e+00 : f32
    %87 = vector.broadcast %cst_30 : f32 to vector<8x128xf32>
    %88 = arith.addf %87, %86 : vector<8x128xf32>
    %89 = arith.divf %87, %88 : vector<8x128xf32>
    %90 = vector.extract_strided_slice %89 {offsets = [0, 0], sizes = [8, 32], strides = [1, 1]} : vector<8x128xf32> to vector<8x32xf32>
    %91 = vector.extract_strided_slice %89 {offsets = [0, 32], sizes = [8, 32], strides = [1, 1]} : vector<8x128xf32> to vector<8x32xf32>
    %92 = vector.extract_strided_slice %89 {offsets = [0, 96], sizes = [8, 32], strides = [1, 1]} : vector<8x128xf32> to vector<8x32xf32>
    %93 = vector.extract_strided_slice %84 {offsets = [0, 64], sizes = [8, 32], strides = [1, 1]} : vector<8x128xf32> to vector<8x32xf32>
    %94 = math.tanh %93 : vector<8x32xf32>
    %95 = arith.mulf %91, %74 : vector<8x32xf32>
    %96 = arith.mulf %90, %94 : vector<8x32xf32>
    %97 = arith.addf %95, %96 : vector<8x32xf32>
    %98 = math.tanh %97 : vector<8x32xf32>
    %99 = arith.mulf %92, %98 : vector<8x32xf32>
    %100 = arith.index_cast %80 : i32 to index
    %c0_31 = arith.constant 0 : index
    %101 = vector.load %arg10[%100, %c0_31] : memref<64x32xf32, #tpu.memory_space<vmem>>, vector<8x32xf32>
    tpu.vector_store %arg10[%100, %c0_31], %99 {strides = array<i32>} : memref<64x32xf32, #tpu.memory_space<vmem>>, vector<8x32xf32>,
    %c4_i32 = arith.constant 4 : i32
    %c8_i32_32 = arith.constant 8 : i32
    %102 = arith.muli %c4_i32, %c8_i32_32 : i32
    %103 = tpu.assume_multiple %102, 8 : i32
    %104 = arith.index_cast %103 : i32 to index
    %c0_33 = arith.constant 0 : index
    %105 = vector.load %arg9[%104, %c0_33] : memref<64x128xf32, #tpu.memory_space<vmem>>, vector<8x128xf32>
    %cst_34 = arith.constant dense<0.000000e+00> : vector<8x128xf32>
    %106 = tpu.matmul %99, %7, %cst_34 {dimension_numbers = #tpu.dot_dimension_numbers<[1], [0], [0], [1], [0, 0, 1, 1], [], []>} : vector<8x32xf32>, vector<32x128xf32>, vector<8x128xf32> -> vector<8x128xf32>
    %107 = arith.addf %105, %106 : vector<8x128xf32>
    %108 = arith.negf %107 : vector<8x128xf32>
    %109 = math.exp %108 : vector<8x128xf32>
    %cst_35 = arith.constant 1.000000e+00 : f32
    %110 = vector.broadcast %cst_35 : f32 to vector<8x128xf32>
    %111 = arith.addf %110, %109 : vector<8x128xf32>
    %112 = arith.divf %110, %111 : vector<8x128xf32>
    %113 = vector.extract_strided_slice %112 {offsets = [0, 0], sizes = [8, 32], strides = [1, 1]} : vector<8x128xf32> to vector<8x32xf32>
    %114 = vector.extract_strided_slice %112 {offsets = [0, 32], sizes = [8, 32], strides = [1, 1]} : vector<8x128xf32> to vector<8x32xf32>
    %115 = vector.extract_strided_slice %112 {offsets = [0, 96], sizes = [8, 32], strides = [1, 1]} : vector<8x128xf32> to vector<8x32xf32>
    %116 = vector.extract_strided_slice %107 {offsets = [0, 64], sizes = [8, 32], strides = [1, 1]} : vector<8x128xf32> to vector<8x32xf32>
    %117 = math.tanh %116 : vector<8x32xf32>
    %118 = arith.mulf %114, %97 : vector<8x32xf32>
    %119 = arith.mulf %113, %117 : vector<8x32xf32>
    %120 = arith.addf %118, %119 : vector<8x32xf32>
    %121 = math.tanh %120 : vector<8x32xf32>
    %122 = arith.mulf %115, %121 : vector<8x32xf32>
    %123 = arith.index_cast %103 : i32 to index
    %c0_36 = arith.constant 0 : index
    %124 = vector.load %arg10[%123, %c0_36] : memref<64x32xf32, #tpu.memory_space<vmem>>, vector<8x32xf32>
    tpu.vector_store %arg10[%123, %c0_36], %122 {strides = array<i32>} : memref<64x32xf32, #tpu.memory_space<vmem>>, vector<8x32xf32>,
    %c5_i32 = arith.constant 5 : i32
    %c8_i32_37 = arith.constant 8 : i32
    %125 = arith.muli %c5_i32, %c8_i32_37 : i32
    %126 = tpu.assume_multiple %125, 8 : i32
    %127 = arith.index_cast %126 : i32 to index
    %c0_38 = arith.constant 0 : index
    %128 = vector.load %arg9[%127, %c0_38] : memref<64x128xf32, #tpu.memory_space<vmem>>, vector<8x128xf32>
    %cst_39 = arith.constant dense<0.000000e+00> : vector<8x128xf32>
    %129 = tpu.matmul %122, %7, %cst_39 {dimension_numbers = #tpu.dot_dimension_numbers<[1], [0], [0], [1], [0, 0, 1, 1], [], []>} : vector<8x32xf32>, vector<32x128xf32>, vector<8x128xf32> -> vector<8x128xf32>
    %130 = arith.addf %128, %129 : vector<8x128xf32>
    %131 = arith.negf %130 : vector<8x128xf32>
    %132 = math.exp %131 : vector<8x128xf32>
    %cst_40 = arith.constant 1.000000e+00 : f32
    %133 = vector.broadcast %cst_40 : f32 to vector<8x128xf32>
    %134 = arith.addf %133, %132 : vector<8x128xf32>
    %135 = arith.divf %133, %134 : vector<8x128xf32>
    %136 = vector.extract_strided_slice %135 {offsets = [0, 0], sizes = [8, 32], strides = [1, 1]} : vector<8x128xf32> to vector<8x32xf32>
    %137 = vector.extract_strided_slice %135 {offsets = [0, 32], sizes = [8, 32], strides = [1, 1]} : vector<8x128xf32> to vector<8x32xf32>
    %138 = vector.extract_strided_slice %135 {offsets = [0, 96], sizes = [8, 32], strides = [1, 1]} : vector<8x128xf32> to vector<8x32xf32>
    %139 = vector.extract_strided_slice %130 {offsets = [0, 64], sizes = [8, 32], strides = [1, 1]} : vector<8x128xf32> to vector<8x32xf32>
    %140 = math.tanh %139 : vector<8x32xf32>
    %141 = arith.mulf %137, %120 : vector<8x32xf32>
    %142 = arith.mulf %136, %140 : vector<8x32xf32>
    %143 = arith.addf %141, %142 : vector<8x32xf32>
    %144 = math.tanh %143 : vector<8x32xf32>
    %145 = arith.mulf %138, %144 : vector<8x32xf32>
    %146 = arith.index_cast %126 : i32 to index
    %c0_41 = arith.constant 0 : index
    %147 = vector.load %arg10[%146, %c0_41] : memref<64x32xf32, #tpu.memory_space<vmem>>, vector<8x32xf32>
    tpu.vector_store %arg10[%146, %c0_41], %145 {strides = array<i32>} : memref<64x32xf32, #tpu.memory_space<vmem>>, vector<8x32xf32>,
    %c6_i32 = arith.constant 6 : i32
    %c8_i32_42 = arith.constant 8 : i32
    %148 = arith.muli %c6_i32, %c8_i32_42 : i32
    %149 = tpu.assume_multiple %148, 8 : i32
    %150 = arith.index_cast %149 : i32 to index
    %c0_43 = arith.constant 0 : index
    %151 = vector.load %arg9[%150, %c0_43] : memref<64x128xf32, #tpu.memory_space<vmem>>, vector<8x128xf32>
    %cst_44 = arith.constant dense<0.000000e+00> : vector<8x128xf32>
    %152 = tpu.matmul %145, %7, %cst_44 {dimension_numbers = #tpu.dot_dimension_numbers<[1], [0], [0], [1], [0, 0, 1, 1], [], []>} : vector<8x32xf32>, vector<32x128xf32>, vector<8x128xf32> -> vector<8x128xf32>
    %153 = arith.addf %151, %152 : vector<8x128xf32>
    %154 = arith.negf %153 : vector<8x128xf32>
    %155 = math.exp %154 : vector<8x128xf32>
    %cst_45 = arith.constant 1.000000e+00 : f32
    %156 = vector.broadcast %cst_45 : f32 to vector<8x128xf32>
    %157 = arith.addf %156, %155 : vector<8x128xf32>
    %158 = arith.divf %156, %157 : vector<8x128xf32>
    %159 = vector.extract_strided_slice %158 {offsets = [0, 0], sizes = [8, 32], strides = [1, 1]} : vector<8x128xf32> to vector<8x32xf32>
    %160 = vector.extract_strided_slice %158 {offsets = [0, 32], sizes = [8, 32], strides = [1, 1]} : vector<8x128xf32> to vector<8x32xf32>
    %161 = vector.extract_strided_slice %158 {offsets = [0, 96], sizes = [8, 32], strides = [1, 1]} : vector<8x128xf32> to vector<8x32xf32>
    %162 = vector.extract_strided_slice %153 {offsets = [0, 64], sizes = [8, 32], strides = [1, 1]} : vector<8x128xf32> to vector<8x32xf32>
    %163 = math.tanh %162 : vector<8x32xf32>
    %164 = arith.mulf %160, %143 : vector<8x32xf32>
    %165 = arith.mulf %159, %163 : vector<8x32xf32>
    %166 = arith.addf %164, %165 : vector<8x32xf32>
    %167 = math.tanh %166 : vector<8x32xf32>
    %168 = arith.mulf %161, %167 : vector<8x32xf32>
    %169 = arith.index_cast %149 : i32 to index
    %c0_46 = arith.constant 0 : index
    %170 = vector.load %arg10[%169, %c0_46] : memref<64x32xf32, #tpu.memory_space<vmem>>, vector<8x32xf32>
    tpu.vector_store %arg10[%169, %c0_46], %168 {strides = array<i32>} : memref<64x32xf32, #tpu.memory_space<vmem>>, vector<8x32xf32>,
    %c7_i32 = arith.constant 7 : i32
    %c8_i32_47 = arith.constant 8 : i32
    %171 = arith.muli %c7_i32, %c8_i32_47 : i32
    %172 = tpu.assume_multiple %171, 8 : i32
    %173 = arith.index_cast %172 : i32 to index
    %c0_48 = arith.constant 0 : index
    %174 = vector.load %arg9[%173, %c0_48] : memref<64x128xf32, #tpu.memory_space<vmem>>, vector<8x128xf32>
    %cst_49 = arith.constant dense<0.000000e+00> : vector<8x128xf32>
    %175 = tpu.matmul %168, %7, %cst_49 {dimension_numbers = #tpu.dot_dimension_numbers<[1], [0], [0], [1], [0, 0, 1, 1], [], []>} : vector<8x32xf32>, vector<32x128xf32>, vector<8x128xf32> -> vector<8x128xf32>
    %176 = arith.addf %174, %175 : vector<8x128xf32>
    %177 = arith.negf %176 : vector<8x128xf32>
    %178 = math.exp %177 : vector<8x128xf32>
    %cst_50 = arith.constant 1.000000e+00 : f32
    %179 = vector.broadcast %cst_50 : f32 to vector<8x128xf32>
    %180 = arith.addf %179, %178 : vector<8x128xf32>
    %181 = arith.divf %179, %180 : vector<8x128xf32>
    %182 = vector.extract_strided_slice %181 {offsets = [0, 0], sizes = [8, 32], strides = [1, 1]} : vector<8x128xf32> to vector<8x32xf32>
    %183 = vector.extract_strided_slice %181 {offsets = [0, 32], sizes = [8, 32], strides = [1, 1]} : vector<8x128xf32> to vector<8x32xf32>
    %184 = vector.extract_strided_slice %181 {offsets = [0, 96], sizes = [8, 32], strides = [1, 1]} : vector<8x128xf32> to vector<8x32xf32>
    %185 = vector.extract_strided_slice %176 {offsets = [0, 64], sizes = [8, 32], strides = [1, 1]} : vector<8x128xf32> to vector<8x32xf32>
    %186 = math.tanh %185 : vector<8x32xf32>
    %187 = arith.mulf %183, %166 : vector<8x32xf32>
    %188 = arith.mulf %182, %186 : vector<8x32xf32>
    %189 = arith.addf %187, %188 : vector<8x32xf32>
    %190 = math.tanh %189 : vector<8x32xf32>
    %191 = arith.mulf %184, %190 : vector<8x32xf32>
    %192 = arith.index_cast %172 : i32 to index
    %c0_51 = arith.constant 0 : index
    %193 = vector.load %arg10[%192, %c0_51] : memref<64x32xf32, #tpu.memory_space<vmem>>, vector<8x32xf32>
    tpu.vector_store %arg10[%192, %c0_51], %191 {strides = array<i32>} : memref<64x32xf32, #tpu.memory_space<vmem>>, vector<8x32xf32>,
    %c8_i32_52 = arith.constant 8 : i32
    %c0_53 = arith.constant 0 : index
    %c0_54 = arith.constant 0 : index
    %194 = vector.load %arg10[%c0_53, %c0_54] : memref<64x32xf32, #tpu.memory_space<vmem>>, vector<64x32xf32>
    %c0_55 = arith.constant 0 : index
    %c0_56 = arith.constant 0 : index
    %195 = vector.load %arg6[%c0_55, %c0_56] : memref<32x128xf32, #tpu.memory_space<vmem>>, vector<32x128xf32>
    %cst_57 = arith.constant dense<0.000000e+00> : vector<64x128xf32>
    %196 = tpu.matmul %194, %195, %cst_57 {dimension_numbers = #tpu.dot_dimension_numbers<[1], [0], [0], [1], [0, 0, 1, 1], [], []>} : vector<64x32xf32>, vector<32x128xf32>, vector<64x128xf32> -> vector<64x128xf32>
    %c0_58 = arith.constant 0 : index
    %c0_59 = arith.constant 0 : index
    %197 = vector.load %arg7[%c0_58, %c0_59] : memref<1x128xf32, #tpu.memory_space<vmem>>, vector<1x128xf32>
    %198 = vector.broadcast %197 : vector<1x128xf32> to vector<64x128xf32>
    %199 = arith.addf %196, %198 : vector<64x128xf32>
    %c0_60 = arith.constant 0 : index
    %c0_61 = arith.constant 0 : index
    %200 = vector.load %arg8[%c0_60, %c0_61] : memref<64x128xf32, #tpu.memory_space<vmem>>, vector<64x128xf32>
    tpu.vector_store %arg8[%c0_60, %c0_61], %199 {strides = array<i32>} : memref<64x128xf32, #tpu.memory_space<vmem>>, vector<64x128xf32>,
    return
  }
}

</mosaic_0001>

<llo_original>
// kernel: tpu_custom_call.1
$region0: #{tpu_custom_call.1}
  #allocation0 [shape = 'u32[]', space=smem, size = 0x4, offset = 0x4, fixed_abs, tag = 'smem constant byte address 0x4 - core index']
  #allocation1 [shape = 'u32[144,128]{1,0:T(1,128)}', space=vmem, size = 0x12000, scoped, tag = 'internal scratch']
  #allocation2 [shape = 'f32[64,128]{1,0:T(8,128)}', space=vmem, size = 0x8000, scoped, tag = 'scratch operand']
  #allocation3 [shape = 'f32[64,32]{1,0:T(8,128)}', space=vmem, size = 0x8000, scoped, tag = 'scratch operand']
  %s0 = inlined_call_operand.vmem [shape: f32[64,32], index: 0, kind: input, shape index: {}]
  %s1 = inlined_call_operand.hbm [shape: f32[8,32], index: 1, kind: input, shape index: {}]
  %s2 = inlined_call_operand.hbm [shape: f32[8,32], index: 2, kind: input, shape index: {}]
  %s3 = inlined_call_operand.vmem [shape: f32[32,128], index: 3, kind: input, shape index: {}]
  %s4 = inlined_call_operand.vmem [shape: f32[32,128], index: 4, kind: input, shape index: {}]
  %s5 = inlined_call_operand.vmem [shape: f32[1,128], index: 5, kind: input, shape index: {}]
  %s6 = inlined_call_operand.vmem [shape: f32[32,128], index: 6, kind: input, shape index: {}]
  %s7 = inlined_call_operand.vmem [shape: f32[1,128], index: 7, kind: input, shape index: {}]
  %s8 = inlined_call_operand.hbm [shape: f32[64,128], index: 8, kind: output, shape index: {}]
  %s9 = sld [smem:[#allocation0]]
  $region50: #{tpu_custom_call.1} parent=0
    _
  %s11 = ssub.s32 1, %s9
  %s12 = scalar_select 0, %s11, %s9
  $region1: #{tpu_custom_call.1} parent=0
    #allocation4 [shape = 'u8[4096]{0}', space=vmem, size = 0x1000, scoped, tag = 'input window, operand 1, single buffered']
    #allocation5 [shape = 's32[1]{0}', space=sflag, size = 0x4, scoped, tag = 'scoped memory for tpu_custom_call.1']
    #allocation6 [shape = 's32[1]{0}', space=sflag, size = 0x4, scoped, tag = 'scoped memory for tpu_custom_call.1']
    #allocation7 [shape = 'u8[4096]{0}', space=vmem, size = 0x1000, scoped, tag = 'input window, operand 2, single buffered']
    #allocation8 [shape = 's32[1]{0}', space=sflag, size = 0x4, scoped, tag = 'scoped memory for tpu_custom_call.1']
    #allocation9 [shape = 'u8[32768]{0}', space=vmem, size = 0x8000, scoped, tag = 'output window, operand 0, single buffered']
    %13 = vsyncpa [#allocation5], 0
    %14 = vsyncpa [#allocation8], 0
    %15 = vsyncpa [#allocation6], 0
    // Predicated region
    $region2: #{tpu_custom_call.1} parent=1 // pred_check
      _
    $region3: #{tpu_custom_call.1} parent=1 // pred_check_branch
      %17 = sbr.rel (0) target = $region5
    $region4: #{tpu_custom_call.1} parent=1 // pred_region
      _
    $region5: #{tpu_custom_call.1} parent=1 // pred_fallthru
      _
    // Predicated region
    $region6: #{tpu_custom_call.1} parent=1 // pred_check
      _
    $region7: #{tpu_custom_call.1} parent=1 // pred_check_branch
      %19 = sbr.rel (0) target = $region9
    $region8: #{tpu_custom_call.1} parent=1 // pred_region
      %s21 = ssub.s32 128, 128
      %22 = vsyncadd [#allocation5], %s21
      %s24 = sshll.u32 [#allocation4], 4
      %s25 = int_to_ptr.vmem [resolvable:$true] %s24
      %27 = dma.hbm_to_vmem [thread:$0]  %s1, 128, %s25, [#allocation5]
    $region9: #{tpu_custom_call.1} parent=1 // pred_fallthru
      _
    // Predicated region
    $region10: #{tpu_custom_call.1} parent=1 // pred_check
      _
    $region11: #{tpu_custom_call.1} parent=1 // pred_check_branch
      %29 = sbr.rel (0) target = $region13
    $region12: #{tpu_custom_call.1} parent=1 // pred_region
      %s31 = ssub.s32 128, 128
      %32 = vsyncadd [#allocation8], %s31
      %s34 = sshll.u32 [#allocation7], 4
      %s35 = int_to_ptr.vmem [resolvable:$true] %s34
      %37 = dma.hbm_to_vmem [thread:$0]  %s2, 128, %s35, [#allocation8]
    $region13: #{tpu_custom_call.1} parent=1 // pred_fallthru
      _
    // Predicated region
    $region14: #{tpu_custom_call.1} parent=1 // pred_check
      _
    $region15: #{tpu_custom_call.1} parent=1 // pred_check_branch
      %39 = sbr.rel (0) target = $region17
    $region16: #{tpu_custom_call.1} parent=1 // pred_region
      _
    $region17: #{tpu_custom_call.1} parent=1 // pred_fallthru
      _
    // Predicated region
    $region18: #{tpu_custom_call.1} parent=1 // pred_check
      _
    $region19: #{tpu_custom_call.1} parent=1 // pred_check_branch
      %41 = sbr.rel (0) target = $region21
    $region20: #{tpu_custom_call.1} parent=1 // pred_region
      _
    $region21: #{tpu_custom_call.1} parent=1 // pred_fallthru
      _
    // Predicated region
    $region22: #{tpu_custom_call.1} parent=1 // pred_check
      _
    $region23: #{tpu_custom_call.1} parent=1 // pred_check_branch
      %43 = sbr.rel (0) target = $region25
    $region24: #{tpu_custom_call.1} parent=1 // pred_region
      _
    $region25: #{tpu_custom_call.1} parent=1 // pred_fallthru
      _
    // Predicated region
    $region26: #{tpu_custom_call.1} parent=1 // pred_check
      _
    $region27: #{tpu_custom_call.1} parent=1 // pred_check_branch
      %45 = sbr.rel (0) target = $region29
    $region28: #{tpu_custom_call.1} parent=1 // pred_region
      _
    $region29: #{tpu_custom_call.1} parent=1 // pred_fallthru
      _
    // Predicated region
    $region30: #{tpu_custom_call.1} parent=1 // pred_check
      _
    $region31: #{tpu_custom_call.1} parent=1 // pred_check_branch
      %47 = sbr.rel (0) target = $region33
    $region32: #{tpu_custom_call.1} parent=1 // pred_region
      _
    $region33: #{tpu_custom_call.1} parent=1 // pred_fallthru
      _
    // Predicated region
    $region34: #{tpu_custom_call.1} parent=1 // pred_check
      _
    $region35: #{tpu_custom_call.1} parent=1 // pred_check_branch
      %49 = sbr.rel (0) target = $region37
    $region36: #{tpu_custom_call.1} parent=1 // pred_region
      %50 = dma.done [#allocation5], 128
    $region37: #{tpu_custom_call.1} parent=1 // pred_fallthru
      _
    // Predicated region
    $region38: #{tpu_custom_call.1} parent=1 // pred_check
      _
    $region39: #{tpu_custom_call.1} parent=1 // pred_check_branch
      %52 = sbr.rel (0) target = $region41
    $region40: #{tpu_custom_call.1} parent=1 // pred_region
      %53 = dma.done [#allocation8], 128
    $region41: #{tpu_custom_call.1} parent=1 // pred_fallthru
      _
    %v54 = vld [vmem:[%s0] sm:$0xff]
    %v55 = vld [vmem:[%s0 + $0x8] sm:$0xff]
    %v56 = vld [vmem:[%s0 + $0x10] sm:$0xff]
    %v57 = vld [vmem:[%s0 + $0x18] sm:$0xff]
    %v58 = vld [vmem:[%s0 + $0x20] sm:$0xff]
    %v59 = vld [vmem:[%s0 + $0x28] sm:$0xff]
    %v60 = vld [vmem:[%s0 + $0x30] sm:$0xff]
    %v61 = vld [vmem:[%s0 + $0x38] sm:$0xff]
    %v62 = vld [vmem:[%s3] sm:$0xff]
    %v63 = vld [vmem:[%s3 + $0x8] sm:$0xff]
    %v64 = vld [vmem:[%s3 + $0x10] sm:$0xff]
    %v65 = vld [vmem:[%s3 + $0x18] sm:$0xff]
    %v66 = vld [vmem:[%s5] sm:$0x1]
    %v68 = vlaneseq
    %v69 = vshrl.u32 %v68, 7
    %v70 = vsub.s32 0, %v69
    %v71 = vrot.slane %v66, %v70
    %vm73 = vcmask 261120
    %v75 = vsel %vm73, %v54, 0
    %v78 = vsel %vm73, %v55, 0
    %v81 = vsel %vm73, %v56, 0
    %v84 = vsel %vm73, %v57, 0
    %v87 = vsel %vm73, %v58, 0
    %v90 = vsel %vm73, %v59, 0
    %v93 = vsel %vm73, %v60, 0
    %v96 = vsel %vm73, %v61, 0
    %98 = vmatprep.subr.mxu0 0.0
    %99 = vmatpush1.msra.mxu0 %v62
    %100 = vmatprep.subr.mxu0 0.0
    %101 = vmatpush1.msra.mxu0 %v63
    %102 = vmatprep.subr.mxu0 0.0
    %103 = vmatpush1.msra.mxu0 %v64
    %104 = vmatprep.subr.mxu0 0.0
    %105 = vmatpush1.msra.mxu0 %v65
    %106 = vmatprep.subr.mxu0 0.0
    %107 = vmatpush1.msra.mxu0 0.0
    %108 = vmatprep.subr.mxu0 0.0
    %109 = vmatpush1.msra.mxu0 0.0
    %110 = vmatprep.subr.mxu0 0.0
    %111 = vmatpush1.msra.mxu0 0.0
    %112 = vmatprep.subr.mxu0 0.0
    %113 = vmatpush1.msra.mxu0 0.0
    %114 = vmatprep.subr.mxu0 0.0
    %115 = vmatpush1.msra.mxu0 0.0
    %116 = vmatprep.subr.mxu0 0.0
    %117 = vmatpush1.msra.mxu0 0.0
    %118 = vmatprep.subr.mxu0 0.0
    %119 = vmatpush1.msra.mxu0 0.0
    %120 = vmatprep.subr.mxu0 0.0
    %121 = vmatpush1.msra.mxu0 0.0
    %122 = vmatprep.subr.mxu0 0.0
    %123 = vmatpush1.msra.mxu0 0.0
    %124 = vmatprep.subr.mxu0 0.0
    %125 = vmatpush1.msra.mxu0 0.0
    %126 = vmatprep.subr.mxu0 0.0
    %127 = vmatpush1.msra.mxu0 0.0
    %128 = vmatprep.subr.mxu0 0.0
    %129 = vmatpush1.msra.mxu0 0.0
    %130 = vmatprep.subr.mxu0 0.0
    %131 = vmatpush1.msra.mxu0 0.0
    %132 = vmatprep.subr.mxu0 0.0
    %133 = vmatpush1.msra.mxu0 0.0
    %134 = vmatprep.subr.mxu0 0.0
    %135 = vmatpush1.msra.mxu0 0.0
    %136 = vmatprep.subr.mxu0 0.0
    %137 = vmatpush1.msra.mxu0 0.0
    %138 = vmatprep.subr.mxu0 0.0
    %139 = vmatpush1.msra.mxu0 0.0
    %140 = vmatprep.subr.mxu0 0.0
    %141 = vmatpush1.msra.mxu0 0.0
    %142 = vmatprep.subr.mxu0 0.0
    %143 = vmatpush1.msra.mxu0 0.0
    %144 = vmatprep.subr.mxu0 0.0
    %145 = vmatpush1.msra.mxu0 0.0
    %146 = vmatprep.subr.mxu0 0.0
    %147 = vmatpush1.msra.mxu0 0.0
    %148 = vmatprep.subr.mxu0 0.0
    %149 = vmatpush1.msra.mxu0 0.0
    %150 = vmatprep.subr.mxu0 0.0
    %151 = vmatpush1.msra.mxu0 0.0
    %152 = vmatprep.subr.mxu0 0.0
    %153 = vmatpush1.msra.mxu0 0.0
    %154 = vmatprep.subr.mxu0 0.0
    %155 = vmatpush1.msra.mxu0 0.0
    %156 = vmatprep.subr.mxu0 0.0
    %157 = vmatpush1.msra.mxu0 0.0
    %158 = vmatprep.subr.mxu0 0.0
    %159 = vmatpush1.msra.mxu0 0.0
    %160 = vmatprep.subr.mxu0 0.0
    %161 = vmatpush1.msra.mxu0 0.0
    %162 = vmatprep.mubr.f32.mxu0 0.0
    %163 = vmatmul.mubr.f32.gmra.mrb[0].mxu0 %v75
    %v164 = vpop.f32.mrb[0].mxu0
    %v165 = vadd.f32 %v71, %v164
    %v166 = vpop.f32.mrb[0].mxu0
    %167 = vmatprep.mubr.f32.mxu0 0.0
    %168 = vmatmul.mubr.f32.gmra.mrb[0].mxu0 %v78
    %v169 = vpop.f32.mrb[0].mxu0
    %v170 = vadd.f32 %v71, %v169
    %v171 = vpop.f32.mrb[0].mxu0
    %172 = vmatprep.mubr.f32.mxu0 0.0
    %173 = vmatmul.mubr.f32.gmra.mrb[0].mxu0 %v81
    %v174 = vpop.f32.mrb[0].mxu0
    %v175 = vadd.f32 %v71, %v174
    %v176 = vpop.f32.mrb[0].mxu0
    %177 = vmatprep.mubr.f32.mxu0 0.0
    %178 = vmatmul.mubr.f32.gmra.mrb[0].mxu0 %v84
    %v179 = vpop.f32.mrb[0].mxu0
    %v180 = vadd.f32 %v71, %v179
    %v181 = vpop.f32.mrb[0].mxu0
    %182 = vmatprep.mubr.f32.mxu0 0.0
    %183 = vmatmul.mubr.f32.gmra.mrb[0].mxu0 %v87
    %v184 = vpop.f32.mrb[0].mxu0
    %v185 = vadd.f32 %v71, %v184
    %v186 = vpop.f32.mrb[0].mxu0
    %187 = vmatprep.mubr.f32.mxu0 0.0
    %188 = vmatmul.mubr.f32.gmra.mrb[0].mxu0 %v90
    %v189 = vpop.f32.mrb[0].mxu0
    %v190 = vadd.f32 %v71, %v189
    %v191 = vpop.f32.mrb[0].mxu0
    %192 = vmatprep.mubr.f32.mxu0 0.0
    %193 = vmatmul.mubr.f32.gmra.mrb[0].mxu0 %v93
    %v194 = vpop.f32.mrb[0].mxu0
    %v195 = vadd.f32 %v71, %v194
    %v196 = vpop.f32.mrb[0].mxu0
    %197 = vmatprep.mubr.f32.mxu0 0.0
    %198 = vmatmul.mubr.f32.gmra.mrb[0].mxu0 %v96
    %v199 = vpop.f32.mrb[0].mxu0
    %v200 = vadd.f32 %v71, %v199
    %v201 = vpop.f32.mrb[0].mxu0
    %202 = vdwg.mxu0
    %203 = vst [vmem:[#allocation2] sm:$0xff] %v165
    %204 = vst [vmem:[#allocation2 + $0x8] sm:$0xff] %v170
    %205 = vst [vmem:[#allocation2 + $0x10] sm:$0xff] %v175
    %206 = vst [vmem:[#allocation2 + $0x18] sm:$0xff] %v180
    %207 = vst [vmem:[#allocation2 + $0x20] sm:$0xff] %v185
    %208 = vst [vmem:[#allocation2 + $0x28] sm:$0xff] %v190
    %209 = vst [vmem:[#allocation2 + $0x30] sm:$0xff] %v195
    %210 = vst [vmem:[#allocation2 + $0x38] sm:$0xff] %v200
    %v211 = vld [vmem:[%s4] sm:$0xff]
    %v212 = vld [vmem:[%s4 + $0x8] sm:$0xff]
    %v213 = vld [vmem:[%s4 + $0x10] sm:$0xff]
    %v214 = vld [vmem:[%s4 + $0x18] sm:$0xff]
    %v215 = vld [vmem:[#allocation4] sm:$0xff]
    %v216 = vld [vmem:[#allocation7] sm:$0xff]
    %v217 = vld [vmem:[#allocation2] sm:$0xff]
    %v219 = vsel %vm73, %v215, 0
    %221 = vmatprep.subr.mxu0 0.0
    %222 = vmatpush1.msra.mxu0 %v211
    %223 = vmatprep.subr.mxu0 0.0
    %224 = vmatpush1.msra.mxu0 %v212
    %225 = vmatprep.subr.mxu0 0.0
    %226 = vmatpush1.msra.mxu0 %v213
    %227 = vmatprep.subr.mxu0 0.0
    %228 = vmatpush1.msra.mxu0 %v214
    %229 = vmatprep.subr.mxu0 0.0
    %230 = vmatpush1.msra.mxu0 0.0
    %231 = vmatprep.subr.mxu0 0.0
    %232 = vmatpush1.msra.mxu0 0.0
    %233 = vmatprep.subr.mxu0 0.0
    %234 = vmatpush1.msra.mxu0 0.0
    %235 = vmatprep.subr.mxu0 0.0
    %236 = vmatpush1.msra.mxu0 0.0
    %237 = vmatprep.subr.mxu0 0.0
    %238 = vmatpush1.msra.mxu0 0.0
    %239 = vmatprep.subr.mxu0 0.0
    %240 = vmatpush1.msra.mxu0 0.0
    %241 = vmatprep.subr.mxu0 0.0
    %242 = vmatpush1.msra.mxu0 0.0
    %243 = vmatprep.subr.mxu0 0.0
    %244 = vmatpush1.msra.mxu0 0.0
    %245 = vmatprep.subr.mxu0 0.0
    %246 = vmatpush1.msra.mxu0 0.0
    %247 = vmatprep.subr.mxu0 0.0
    %248 = vmatpush1.msra.mxu0 0.0
    %249 = vmatprep.subr.mxu0 0.0
    %250 = vmatpush1.msra.mxu0 0.0
    %251 = vmatprep.subr.mxu0 0.0
    %252 = vmatpush1.msra.mxu0 0.0
    %253 = vmatprep.subr.mxu0 0.0
    %254 = vmatpush1.msra.mxu0 0.0
    %255 = vmatprep.subr.mxu0 0.0
    %256 = vmatpush1.msra.mxu0 0.0
    %257 = vmatprep.subr.mxu0 0.0
    %258 = vmatpush1.msra.mxu0 0.0
    %259 = vmatprep.subr.mxu0 0.0
    %260 = vmatpush1.msra.mxu0 0.0
    %261 = vmatprep.subr.mxu0 0.0
    %262 = vmatpush1.msra.mxu0 0.0
    %263 = vmatprep.subr.mxu0 0.0
    %264 = vmatpush1.msra.mxu0 0.0
    %265 = vmatprep.subr.mxu0 0.0
    %266 = vmatpush1.msra.mxu0 0.0
    %267 = vmatprep.subr.mxu0 0.0
    %268 = vmatpush1.msra.mxu0 0.0
    %269 = vmatprep.subr.mxu0 0.0
    %270 = vmatpush1.msra.mxu0 0.0
    %271 = vmatprep.subr.mxu0 0.0
    %272 = vmatpush1.msra.mxu0 0.0
    %273 = vmatprep.subr.mxu0 0.0
    %274 = vmatpush1.msra.mxu0 0.0
    %275 = vmatprep.subr.mxu0 0.0
    %276 = vmatpush1.msra.mxu0 0.0
    %277 = vmatprep.subr.mxu0 0.0
    %278 = vmatpush1.msra.mxu0 0.0
    %279 = vmatprep.subr.mxu0 0.0
    %280 = vmatpush1.msra.mxu0 0.0
    %281 = vmatprep.subr.mxu0 0.0
    %282 = vmatpush1.msra.mxu0 0.0
    %283 = vmatprep.subr.mxu0 0.0
    %284 = vmatpush1.msra.mxu0 0.0
    %285 = vmatprep.mubr.f32.mxu0 0.0
    %286 = vmatmul.mubr.f32.gmra.mrb[0].mxu0 %v219
    %v287 = vpop.f32.mrb[0].mxu0
    %v288 = vadd.f32 0.0, %v287
    %v289 = vpop.f32.mrb[0].mxu0
    %290 = vdwg.mxu0
    %v291 = vadd.f32 %v217, %v288
    %v292 = vxor.u32 %v291, 2147483648
    %v293 = vmul.f32 %v292, 1.442695
    %v294 = vpow.pop %v293
    %v295 = vadd.f32 %v294, 1.0
    %v296 = vrcp.pop %v295
    %v297 = vmul.f32 1.0, %v296
    %v298 = vtanh.pop %v291
    %300 = vrot.lane.b32.xlu0 %v216, 32
    %v301 = vpop.permute.xlu0 %300
    %v303 = vmul.f32 %v297, %v301
    %305 = vrot.lane.b32.xlu0 %v298, 64
    %v306 = vpop.permute.xlu0 %305
    %v308 = vmul.f32 %v297, %v306
    %310 = vrot.lane.b32.xlu0 %v308, 32
    %v311 = vpop.permute.xlu0 %310
    %v313 = vadd.f32 %v303, %v311
    %v314 = vtanh.pop %v313
    %316 = vrot.lane.b32.xlu0 %v314, 64
    %v317 = vpop.permute.xlu0 %316
    %v319 = vmul.f32 %v297, %v317
    %321 = vrot.lane.b32.xlu0 %v319, 32
    %v322 = vpop.permute.xlu0 %321
    %324 = vst.msk [vmem:[#allocation3] sm:$0xff] %vm73, %v322
    %s325 = scalar_lea.vmem [#allocation2], 8
    %v326 = vld [vmem:[%s325] sm:$0xff]
    %v327 = vsel %vm73, %v322, 0
    %329 = vmatprep.subr.mxu0 0.0
    %330 = vmatpush1.msra.mxu0 %v211
    %331 = vmatprep.subr.mxu0 0.0
    %332 = vmatpush1.msra.mxu0 %v212
    %333 = vmatprep.subr.mxu0 0.0
    %334 = vmatpush1.msra.mxu0 %v213
    %335 = vmatprep.subr.mxu0 0.0
    %336 = vmatpush1.msra.mxu0 %v214
    %337 = vmatprep.subr.mxu0 0.0
    %338 = vmatpush1.msra.mxu0 0.0
    %339 = vmatprep.subr.mxu0 0.0
    %340 = vmatpush1.msra.mxu0 0.0
    %341 = vmatprep.subr.mxu0 0.0
    %342 = vmatpush1.msra.mxu0 0.0
    %343 = vmatprep.subr.mxu0 0.0
    %344 = vmatpush1.msra.mxu0 0.0
    %345 = vmatprep.subr.mxu0 0.0
    %346 = vmatpush1.msra.mxu0 0.0
    %347 = vmatprep.subr.mxu0 0.0
    %348 = vmatpush1.msra.mxu0 0.0
    %349 = vmatprep.subr.mxu0 0.0
    %350 = vmatpush1.msra.mxu0 0.0
    %351 = vmatprep.subr.mxu0 0.0
    %352 = vmatpush1.msra.mxu0 0.0
    %353 = vmatprep.subr.mxu0 0.0
    %354 = vmatpush1.msra.mxu0 0.0
    %355 = vmatprep.subr.mxu0 0.0
    %356 = vmatpush1.msra.mxu0 0.0
    %357 = vmatprep.subr.mxu0 0.0
    %358 = vmatpush1.msra.mxu0 0.0
    %359 = vmatprep.subr.mxu0 0.0
    %360 = vmatpush1.msra.mxu0 0.0
    %361 = vmatprep.subr.mxu0 0.0
    %362 = vmatpush1.msra.mxu0 0.0
    %363 = vmatprep.subr.mxu0 0.0
    %364 = vmatpush1.msra.mxu0 0.0
    %365 = vmatprep.subr.mxu0 0.0
    %366 = vmatpush1.msra.mxu0 0.0
    %367 = vmatprep.subr.mxu0 0.0
    %368 = vmatpush1.msra.mxu0 0.0
    %369 = vmatprep.subr.mxu0 0.0
    %370 = vmatpush1.msra.mxu0 0.0
    %371 = vmatprep.subr.mxu0 0.0
    %372 = vmatpush1.msra.mxu0 0.0
    %373 = vmatprep.subr.mxu0 0.0
    %374 = vmatpush1.msra.mxu0 0.0
    %375 = vmatprep.subr.mxu0 0.0
    %376 = vmatpush1.msra.mxu0 0.0
    %377 = vmatprep.subr.mxu0 0.0
    %378 = vmatpush1.msra.mxu0 0.0
    %379 = vmatprep.subr.mxu0 0.0
    %380 = vmatpush1.msra.mxu0 0.0
    %381 = vmatprep.subr.mxu0 0.0
    %382 = vmatpush1.msra.mxu0 0.0
    %383 = vmatprep.subr.mxu0 0.0
    %384 = vmatpush1.msra.mxu0 0.0
    %385 = vmatprep.subr.mxu0 0.0
    %386 = vmatpush1.msra.mxu0 0.0
    %387 = vmatprep.subr.mxu0 0.0
    %388 = vmatpush1.msra.mxu0 0.0
    %389 = vmatprep.subr.mxu0 0.0
    %390 = vmatpush1.msra.mxu0 0.0
    %391 = vmatprep.subr.mxu0 0.0
    %392 = vmatpush1.msra.mxu0 0.0
    %393 = vmatprep.mubr.f32.mxu0 0.0
    %394 = vmatmul.mubr.f32.gmra.mrb[0].mxu0 %v327
    %v395 = vpop.f32.mrb[0].mxu0
    %v396 = vadd.f32 0.0, %v395
    %v397 = vpop.f32.mrb[0].mxu0
    %398 = vdwg.mxu0
    %v399 = vadd.f32 %v326, %v396
    %v400 = vxor.u32 %v399, 2147483648
    %v401 = vmul.f32 %v400, 1.442695
    %v402 = vpow.pop %v401
    %v403 = vadd.f32 %v402, 1.0
    %v404 = vrcp.pop %v403
    %v405 = vmul.f32 1.0, %v404
    %v406 = vtanh.pop %v399
    %v407 = vmul.f32 %v405, %v313
    %409 = vrot.lane.b32.xlu0 %v406, 64
    %v410 = vpop.permute.xlu0 %409
    %v412 = vmul.f32 %v405, %v410
    %414 = vrot.lane.b32.xlu0 %v412, 32
    %v415 = vpop.permute.xlu0 %414
    %v417 = vadd.f32 %v407, %v415
    %v418 = vtanh.pop %v417
    %420 = vrot.lane.b32.xlu0 %v418, 64
    %v421 = vpop.permute.xlu0 %420
    %v423 = vmul.f32 %v405, %v421
    %425 = vrot.lane.b32.xlu0 %v423, 32
    %v426 = vpop.permute.xlu0 %425
    %s428 = scalar_lea.vmem [#allocation3], 8
    %429 = vst.msk [vmem:[%s428] sm:$0xff] %vm73, %v426
    %s430 = scalar_lea.vmem [#allocation2], 16
    %v431 = vld [vmem:[%s430] sm:$0xff]
    %v432 = vsel %vm73, %v426, 0
    %434 = vmatprep.subr.mxu0 0.0
    %435 = vmatpush1.msra.mxu0 %v211
    %436 = vmatprep.subr.mxu0 0.0
    %437 = vmatpush1.msra.mxu0 %v212
    %438 = vmatprep.subr.mxu0 0.0
    %439 = vmatpush1.msra.mxu0 %v213
    %440 = vmatprep.subr.mxu0 0.0
    %441 = vmatpush1.msra.mxu0 %v214
    %442 = vmatprep.subr.mxu0 0.0
    %443 = vmatpush1.msra.mxu0 0.0
    %444 = vmatprep.subr.mxu0 0.0
    %445 = vmatpush1.msra.mxu0 0.0
    %446 = vmatprep.subr.mxu0 0.0
    %447 = vmatpush1.msra.mxu0 0.0
    %448 = vmatprep.subr.mxu0 0.0
    %449 = vmatpush1.msra.mxu0 0.0
    %450 = vmatprep.subr.mxu0 0.0
    %451 = vmatpush1.msra.mxu0 0.0
    %452 = vmatprep.subr.mxu0 0.0
    %453 = vmatpush1.msra.mxu0 0.0
    %454 = vmatprep.subr.mxu0 0.0
    %455 = vmatpush1.msra.mxu0 0.0
    %456 = vmatprep.subr.mxu0 0.0
    %457 = vmatpush1.msra.mxu0 0.0
    %458 = vmatprep.subr.mxu0 0.0
    %459 = vmatpush1.msra.mxu0 0.0
    %460 = vmatprep.subr.mxu0 0.0
    %461 = vmatpush1.msra.mxu0 0.0
    %462 = vmatprep.subr.mxu0 0.0
    %463 = vmatpush1.msra.mxu0 0.0
    %464 = vmatprep.subr.mxu0 0.0
    %465 = vmatpush1.msra.mxu0 0.0
    %466 = vmatprep.subr.mxu0 0.0
    %467 = vmatpush1.msra.mxu0 0.0
    %468 = vmatprep.subr.mxu0 0.0
    %469 = vmatpush1.msra.mxu0 0.0
    %470 = vmatprep.subr.mxu0 0.0
    %471 = vmatpush1.msra.mxu0 0.0
    %472 = vmatprep.subr.mxu0 0.0
    %473 = vmatpush1.msra.mxu0 0.0
    %474 = vmatprep.subr.mxu0 0.0
    %475 = vmatpush1.msra.mxu0 0.0
    %476 = vmatprep.subr.mxu0 0.0
    %477 = vmatpush1.msra.mxu0 0.0
    %478 = vmatprep.subr.mxu0 0.0
    %479 = vmatpush1.msra.mxu0 0.0
    %480 = vmatprep.subr.mxu0 0.0
    %481 = vmatpush1.msra.mxu0 0.0
    %482 = vmatprep.subr.mxu0 0.0
    %483 = vmatpush1.msra.mxu0 0.0
    %484 = vmatprep.subr.mxu0 0.0
    %485 = vmatpush1.msra.mxu0 0.0
    %486 = vmatprep.subr.mxu0 0.0
    %487 = vmatpush1.msra.mxu0 0.0
    %488 = vmatprep.subr.mxu0 0.0
    %489 = vmatpush1.msra.mxu0 0.0
    %490 = vmatprep.subr.mxu0 0.0
    %491 = vmatpush1.msra.mxu0 0.0
    %492 = vmatprep.subr.mxu0 0.0
    %493 = vmatpush1.msra.mxu0 0.0
    %494 = vmatprep.subr.mxu0 0.0
    %495 = vmatpush1.msra.mxu0 0.0
    %496 = vmatprep.subr.mxu0 0.0
    %497 = vmatpush1.msra.mxu0 0.0
    %498 = vmatprep.mubr.f32.mxu0 0.0
    %499 = vmatmul.mubr.f32.gmra.mrb[0].mxu0 %v432
    %v500 = vpop.f32.mrb[0].mxu0
    %v501 = vadd.f32 0.0, %v500
    %v502 = vpop.f32.mrb[0].mxu0
    %503 = vdwg.mxu0
    %v504 = vadd.f32 %v431, %v501
    %v505 = vxor.u32 %v504, 2147483648
    %v506 = vmul.f32 %v505, 1.442695
    %v507 = vpow.pop %v506
    %v508 = vadd.f32 %v507, 1.0
    %v509 = vrcp.pop %v508
    %v510 = vmul.f32 1.0, %v509
    %v511 = vtanh.pop %v504
    %v512 = vmul.f32 %v510, %v417
    %514 = vrot.lane.b32.xlu0 %v511, 64
    %v515 = vpop.permute.xlu0 %514
    %v517 = vmul.f32 %v510, %v515
    %519 = vrot.lane.b32.xlu0 %v517, 32
    %v520 = vpop.permute.xlu0 %519
    %v522 = vadd.f32 %v512, %v520
    %v523 = vtanh.pop %v522
    %525 = vrot.lane.b32.xlu0 %v523, 64
    %v526 = vpop.permute.xlu0 %525
    %v528 = vmul.f32 %v510, %v526
    %530 = vrot.lane.b32.xlu0 %v528, 32
    %v531 = vpop.permute.xlu0 %530
    %s533 = scalar_lea.vmem [#allocation3], 16
    %534 = vst.msk [vmem:[%s533] sm:$0xff] %vm73, %v531
    %s535 = scalar_lea.vmem [#allocation2], 24
    %v536 = vld [vmem:[%s535] sm:$0xff]
    %v537 = vsel %vm73, %v531, 0
    %539 = vmatprep.subr.mxu0 0.0
    %540 = vmatpush1.msra.mxu0 %v211
    %541 = vmatprep.subr.mxu0 0.0
    %542 = vmatpush1.msra.mxu0 %v212
    %543 = vmatprep.subr.mxu0 0.0
    %544 = vmatpush1.msra.mxu0 %v213
    %545 = vmatprep.subr.mxu0 0.0
    %546 = vmatpush1.msra.mxu0 %v214
    %547 = vmatprep.subr.mxu0 0.0
    %548 = vmatpush1.msra.mxu0 0.0
    %549 = vmatprep.subr.mxu0 0.0
    %550 = vmatpush1.msra.mxu0 0.0
    %551 = vmatprep.subr.mxu0 0.0
    %552 = vmatpush1.msra.mxu0 0.0
    %553 = vmatprep.subr.mxu0 0.0
    %554 = vmatpush1.msra.mxu0 0.0
    %555 = vmatprep.subr.mxu0 0.0
    %556 = vmatpush1.msra.mxu0 0.0
    %557 = vmatprep.subr.mxu0 0.0
    %558 = vmatpush1.msra.mxu0 0.0
    %559 = vmatprep.subr.mxu0 0.0
    %560 = vmatpush1.msra.mxu0 0.0
    %561 = vmatprep.subr.mxu0 0.0
    %562 = vmatpush1.msra.mxu0 0.0
    %563 = vmatprep.subr.mxu0 0.0
    %564 = vmatpush1.msra.mxu0 0.0
    %565 = vmatprep.subr.mxu0 0.0
    %566 = vmatpush1.msra.mxu0 0.0
    %567 = vmatprep.subr.mxu0 0.0
    %568 = vmatpush1.msra.mxu0 0.0
    %569 = vmatprep.subr.mxu0 0.0
    %570 = vmatpush1.msra.mxu0 0.0
    %571 = vmatprep.subr.mxu0 0.0
    %572 = vmatpush1.msra.mxu0 0.0
    %573 = vmatprep.subr.mxu0 0.0
    %574 = vmatpush1.msra.mxu0 0.0
    %575 = vmatprep.subr.mxu0 0.0
    %576 = vmatpush1.msra.mxu0 0.0
    %577 = vmatprep.subr.mxu0 0.0
    %578 = vmatpush1.msra.mxu0 0.0
    %579 = vmatprep.subr.mxu0 0.0
    %580 = vmatpush1.msra.mxu0 0.0
    %581 = vmatprep.subr.mxu0 0.0
    %582 = vmatpush1.msra.mxu0 0.0
    %583 = vmatprep.subr.mxu0 0.0
    %584 = vmatpush1.msra.mxu0 0.0
    %585 = vmatprep.subr.mxu0 0.0
    %586 = vmatpush1.msra.mxu0 0.0
    %587 = vmatprep.subr.mxu0 0.0
    %588 = vmatpush1.msra.mxu0 0.0
    %589 = vmatprep.subr.mxu0 0.0
    %590 = vmatpush1.msra.mxu0 0.0
    %591 = vmatprep.subr.mxu0 0.0
    %592 = vmatpush1.msra.mxu0 0.0
    %593 = vmatprep.subr.mxu0 0.0
    %594 = vmatpush1.msra.mxu0 0.0
    %595 = vmatprep.subr.mxu0 0.0
    %596 = vmatpush1.msra.mxu0 0.0
    %597 = vmatprep.subr.mxu0 0.0
    %598 = vmatpush1.msra.mxu0 0.0
    %599 = vmatprep.subr.mxu0 0.0
    %600 = vmatpush1.msra.mxu0 0.0
    %601 = vmatprep.subr.mxu0 0.0
    %602 = vmatpush1.msra.mxu0 0.0
    %603 = vmatprep.mubr.f32.mxu0 0.0
    %604 = vmatmul.mubr.f32.gmra.mrb[0].mxu0 %v537
    %v605 = vpop.f32.mrb[0].mxu0
    %v606 = vadd.f32 0.0, %v605
    %v607 = vpop.f32.mrb[0].mxu0
    %608 = vdwg.mxu0
    %v609 = vadd.f32 %v536, %v606
    %v610 = vxor.u32 %v609, 2147483648
    %v611 = vmul.f32 %v610, 1.442695
    %v612 = vpow.pop %v611
    %v613 = vadd.f32 %v612, 1.0
    %v614 = vrcp.pop %v613
    %v615 = vmul.f32 1.0, %v614
    %v616 = vtanh.pop %v609
    %v617 = vmul.f32 %v615, %v522
    %619 = vrot.lane.b32.xlu0 %v616, 64
    %v620 = vpop.permute.xlu0 %619
    %v622 = vmul.f32 %v615, %v620
    %624 = vrot.lane.b32.xlu0 %v622, 32
    %v625 = vpop.permute.xlu0 %624
    %v627 = vadd.f32 %v617, %v625
    %v628 = vtanh.pop %v627
    %630 = vrot.lane.b32.xlu0 %v628, 64
    %v631 = vpop.permute.xlu0 %630
    %v633 = vmul.f32 %v615, %v631
    %635 = vrot.lane.b32.xlu0 %v633, 32
    %v636 = vpop.permute.xlu0 %635
    %s638 = scalar_lea.vmem [#allocation3], 24
    %639 = vst.msk [vmem:[%s638] sm:$0xff] %vm73, %v636
    %s640 = scalar_lea.vmem [#allocation2], 32
    %v641 = vld [vmem:[%s640] sm:$0xff]
    %v642 = vsel %vm73, %v636, 0
    %644 = vmatprep.subr.mxu0 0.0
    %645 = vmatpush1.msra.mxu0 %v211
    %646 = vmatprep.subr.mxu0 0.0
    %647 = vmatpush1.msra.mxu0 %v212
    %648 = vmatprep.subr.mxu0 0.0
    %649 = vmatpush1.msra.mxu0 %v213
    %650 = vmatprep.subr.mxu0 0.0
    %651 = vmatpush1.msra.mxu0 %v214
    %652 = vmatprep.subr.mxu0 0.0
    %653 = vmatpush1.msra.mxu0 0.0
    %654 = vmatprep.subr.mxu0 0.0
    %655 = vmatpush1.msra.mxu0 0.0
    %656 = vmatprep.subr.mxu0 0.0
    %657 = vmatpush1.msra.mxu0 0.0
    %658 = vmatprep.subr.mxu0 0.0
    %659 = vmatpush1.msra.mxu0 0.0
    %660 = vmatprep.subr.mxu0 0.0
    %661 = vmatpush1.msra.mxu0 0.0
    %662 = vmatprep.subr.mxu0 0.0
    %663 = vmatpush1.msra.mxu0 0.0
    %664 = vmatprep.subr.mxu0 0.0
    %665 = vmatpush1.msra.mxu0 0.0
    %666 = vmatprep.subr.mxu0 0.0
    %667 = vmatpush1.msra.mxu0 0.0
    %668 = vmatprep.subr.mxu0 0.0
    %669 = vmatpush1.msra.mxu0 0.0
    %670 = vmatprep.subr.mxu0 0.0
    %671 = vmatpush1.msra.mxu0 0.0
    %672 = vmatprep.subr.mxu0 0.0
    %673 = vmatpush1.msra.mxu0 0.0
    %674 = vmatprep.subr.mxu0 0.0
    %675 = vmatpush1.msra.mxu0 0.0
    %676 = vmatprep.subr.mxu0 0.0
    %677 = vmatpush1.msra.mxu0 0.0
    %678 = vmatprep.subr.mxu0 0.0
    %679 = vmatpush1.msra.mxu0 0.0
    %680 = vmatprep.subr.mxu0 0.0
    %681 = vmatpush1.msra.mxu0 0.0
    %682 = vmatprep.subr.mxu0 0.0
    %683 = vmatpush1.msra.mxu0 0.0
    %684 = vmatprep.subr.mxu0 0.0
    %685 = vmatpush1.msra.mxu0 0.0
    %686 = vmatprep.subr.mxu0 0.0
    %687 = vmatpush1.msra.mxu0 0.0
    %688 = vmatprep.subr.mxu0 0.0
    %689 = vmatpush1.msra.mxu0 0.0
    %690 = vmatprep.subr.mxu0 0.0
    %691 = vmatpush1.msra.mxu0 0.0
    %692 = vmatprep.subr.mxu0 0.0
    %693 = vmatpush1.msra.mxu0 0.0
    %694 = vmatprep.subr.mxu0 0.0
    %695 = vmatpush1.msra.mxu0 0.0
    %696 = vmatprep.subr.mxu0 0.0
    %697 = vmatpush1.msra.mxu0 0.0
    %698 = vmatprep.subr.mxu0 0.0
    %699 = vmatpush1.msra.mxu0 0.0
    %700 = vmatprep.subr.mxu0 0.0
    %701 = vmatpush1.msra.mxu0 0.0
    %702 = vmatprep.subr.mxu0 0.0
    %703 = vmatpush1.msra.mxu0 0.0
    %704 = vmatprep.subr.mxu0 0.0
    %705 = vmatpush1.msra.mxu0 0.0
    %706 = vmatprep.subr.mxu0 0.0
    %707 = vmatpush1.msra.mxu0 0.0
    %708 = vmatprep.mubr.f32.mxu0 0.0
    %709 = vmatmul.mubr.f32.gmra.mrb[0].mxu0 %v642
    %v710 = vpop.f32.mrb[0].mxu0
    %v711 = vadd.f32 0.0, %v710
    %v712 = vpop.f32.mrb[0].mxu0
    %713 = vdwg.mxu0
    %v714 = vadd.f32 %v641, %v711
    %v715 = vxor.u32 %v714, 2147483648
    %v716 = vmul.f32 %v715, 1.442695
    %v717 = vpow.pop %v716
    %v718 = vadd.f32 %v717, 1.0
    %v719 = vrcp.pop %v718
    %v720 = vmul.f32 1.0, %v719
    %v721 = vtanh.pop %v714
    %v722 = vmul.f32 %v720, %v627
    %724 = vrot.lane.b32.xlu0 %v721, 64
    %v725 = vpop.permute.xlu0 %724
    %v727 = vmul.f32 %v720, %v725
    %729 = vrot.lane.b32.xlu0 %v727, 32
    %v730 = vpop.permute.xlu0 %729
    %v732 = vadd.f32 %v722, %v730
    %v733 = vtanh.pop %v732
    %735 = vrot.lane.b32.xlu0 %v733, 64
    %v736 = vpop.permute.xlu0 %735
    %v738 = vmul.f32 %v720, %v736
    %740 = vrot.lane.b32.xlu0 %v738, 32
    %v741 = vpop.permute.xlu0 %740
    %s743 = scalar_lea.vmem [#allocation3], 32
    %744 = vst.msk [vmem:[%s743] sm:$0xff] %vm73, %v741
    %s745 = scalar_lea.vmem [#allocation2], 40
    %v746 = vld [vmem:[%s745] sm:$0xff]
    %v747 = vsel %vm73, %v741, 0
    %749 = vmatprep.subr.mxu0 0.0
    %750 = vmatpush1.msra.mxu0 %v211
    %751 = vmatprep.subr.mxu0 0.0
    %752 = vmatpush1.msra.mxu0 %v212
    %753 = vmatprep.subr.mxu0 0.0
    %754 = vmatpush1.msra.mxu0 %v213
    %755 = vmatprep.subr.mxu0 0.0
    %756 = vmatpush1.msra.mxu0 %v214
    %757 = vmatprep.subr.mxu0 0.0
    %758 = vmatpush1.msra.mxu0 0.0
    %759 = vmatprep.subr.mxu0 0.0
    %760 = vmatpush1.msra.mxu0 0.0
    %761 = vmatprep.subr.mxu0 0.0
    %762 = vmatpush1.msra.mxu0 0.0
    %763 = vmatprep.subr.mxu0 0.0
    %764 = vmatpush1.msra.mxu0 0.0
    %765 = vmatprep.subr.mxu0 0.0
    %766 = vmatpush1.msra.mxu0 0.0
    %767 = vmatprep.subr.mxu0 0.0
    %768 = vmatpush1.msra.mxu0 0.0
    %769 = vmatprep.subr.mxu0 0.0
    %770 = vmatpush1.msra.mxu0 0.0
    %771 = vmatprep.subr.mxu0 0.0
    %772 = vmatpush1.msra.mxu0 0.0
    %773 = vmatprep.subr.mxu0 0.0
    %774 = vmatpush1.msra.mxu0 0.0
    %775 = vmatprep.subr.mxu0 0.0
    %776 = vmatpush1.msra.mxu0 0.0
    %777 = vmatprep.subr.mxu0 0.0
    %778 = vmatpush1.msra.mxu0 0.0
    %779 = vmatprep.subr.mxu0 0.0
    %780 = vmatpush1.msra.mxu0 0.0
    %781 = vmatprep.subr.mxu0 0.0
    %782 = vmatpush1.msra.mxu0 0.0
    %783 = vmatprep.subr.mxu0 0.0
    %784 = vmatpush1.msra.mxu0 0.0
    %785 = vmatprep.subr.mxu0 0.0
    %786 = vmatpush1.msra.mxu0 0.0
    %787 = vmatprep.subr.mxu0 0.0
    %788 = vmatpush1.msra.mxu0 0.0
    %789 = vmatprep.subr.mxu0 0.0
    %790 = vmatpush1.msra.mxu0 0.0
    %791 = vmatprep.subr.mxu0 0.0
    %792 = vmatpush1.msra.mxu0 0.0
    %793 = vmatprep.subr.mxu0 0.0
    %794 = vmatpush1.msra.mxu0 0.0
    %795 = vmatprep.subr.mxu0 0.0
    %796 = vmatpush1.msra.mxu0 0.0
    %797 = vmatprep.subr.mxu0 0.0
    %798 = vmatpush1.msra.mxu0 0.0
    %799 = vmatprep.subr.mxu0 0.0
    %800 = vmatpush1.msra.mxu0 0.0
    %801 = vmatprep.subr.mxu0 0.0
    %802 = vmatpush1.msra.mxu0 0.0
    %803 = vmatprep.subr.mxu0 0.0
    %804 = vmatpush1.msra.mxu0 0.0
    %805 = vmatprep.subr.mxu0 0.0
    %806 = vmatpush1.msra.mxu0 0.0
    %807 = vmatprep.subr.mxu0 0.0
    %808 = vmatpush1.msra.mxu0 0.0
    %809 = vmatprep.subr.mxu0 0.0
    %810 = vmatpush1.msra.mxu0 0.0
    %811 = vmatprep.subr.mxu0 0.0
    %812 = vmatpush1.msra.mxu0 0.0
    %813 = vmatprep.mubr.f32.mxu0 0.0
    %814 = vmatmul.mubr.f32.gmra.mrb[0].mxu0 %v747
    %v815 = vpop.f32.mrb[0].mxu0
    %v816 = vadd.f32 0.0, %v815
    %v817 = vpop.f32.mrb[0].mxu0
    %818 = vdwg.mxu0
    %v819 = vadd.f32 %v746, %v816
    %v820 = vxor.u32 %v819, 2147483648
    %v821 = vmul.f32 %v820, 1.442695
    %v822 = vpow.pop %v821
    %v823 = vadd.f32 %v822, 1.0
    %v824 = vrcp.pop %v823
    %v825 = vmul.f32 1.0, %v824
    %v826 = vtanh.pop %v819
    %v827 = vmul.f32 %v825, %v732
    %829 = vrot.lane.b32.xlu0 %v826, 64
    %v830 = vpop.permute.xlu0 %829
    %v832 = vmul.f32 %v825, %v830
    %834 = vrot.lane.b32.xlu0 %v832, 32
    %v835 = vpop.permute.xlu0 %834
    %v837 = vadd.f32 %v827, %v835
    %v838 = vtanh.pop %v837
    %840 = vrot.lane.b32.xlu0 %v838, 64
    %v841 = vpop.permute.xlu0 %840
    %v843 = vmul.f32 %v825, %v841
    %845 = vrot.lane.b32.xlu0 %v843, 32
    %v846 = vpop.permute.xlu0 %845
    %s848 = scalar_lea.vmem [#allocation3], 40
    %849 = vst.msk [vmem:[%s848] sm:$0xff] %vm73, %v846
    %s850 = scalar_lea.vmem [#allocation2], 48
    %v851 = vld [vmem:[%s850] sm:$0xff]
    %v852 = vsel %vm73, %v846, 0
    %854 = vmatprep.subr.mxu0 0.0
    %855 = vmatpush1.msra.mxu0 %v211
    %856 = vmatprep.subr.mxu0 0.0
    %857 = vmatpush1.msra.mxu0 %v212
    %858 = vmatprep.subr.mxu0 0.0
    %859 = vmatpush1.msra.mxu0 %v213
    %860 = vmatprep.subr.mxu0 0.0
    %861 = vmatpush1.msra.mxu0 %v214
    %862 = vmatprep.subr.mxu0 0.0
    %863 = vmatpush1.msra.mxu0 0.0
    %864 = vmatprep.subr.mxu0 0.0
    %865 = vmatpush1.msra.mxu0 0.0
    %866 = vmatprep.subr.mxu0 0.0
    %867 = vmatpush1.msra.mxu0 0.0
    %868 = vmatprep.subr.mxu0 0.0
    %869 = vmatpush1.msra.mxu0 0.0
    %870 = vmatprep.subr.mxu0 0.0
    %871 = vmatpush1.msra.mxu0 0.0
    %872 = vmatprep.subr.mxu0 0.0
    %873 = vmatpush1.msra.mxu0 0.0
    %874 = vmatprep.subr.mxu0 0.0
    %875 = vmatpush1.msra.mxu0 0.0
    %876 = vmatprep.subr.mxu0 0.0
    %877 = vmatpush1.msra.mxu0 0.0
    %878 = vmatprep.subr.mxu0 0.0
    %879 = vmatpush1.msra.mxu0 0.0
    %880 = vmatprep.subr.mxu0 0.0
    %881 = vmatpush1.msra.mxu0 0.0
    %882 = vmatprep.subr.mxu0 0.0
    %883 = vmatpush1.msra.mxu0 0.0
    %884 = vmatprep.subr.mxu0 0.0
    %885 = vmatpush1.msra.mxu0 0.0
    %886 = vmatprep.subr.mxu0 0.0
    %887 = vmatpush1.msra.mxu0 0.0
    %888 = vmatprep.subr.mxu0 0.0
    %889 = vmatpush1.msra.mxu0 0.0
    %890 = vmatprep.subr.mxu0 0.0
    %891 = vmatpush1.msra.mxu0 0.0
    %892 = vmatprep.subr.mxu0 0.0
    %893 = vmatpush1.msra.mxu0 0.0
    %894 = vmatprep.subr.mxu0 0.0
    %895 = vmatpush1.msra.mxu0 0.0
    %896 = vmatprep.subr.mxu0 0.0
    %897 = vmatpush1.msra.mxu0 0.0
    %898 = vmatprep.subr.mxu0 0.0
    %899 = vmatpush1.msra.mxu0 0.0
    %900 = vmatprep.subr.mxu0 0.0
    %901 = vmatpush1.msra.mxu0 0.0
    %902 = vmatprep.subr.mxu0 0.0
    %903 = vmatpush1.msra.mxu0 0.0
    %904 = vmatprep.subr.mxu0 0.0
    %905 = vmatpush1.msra.mxu0 0.0
    %906 = vmatprep.subr.mxu0 0.0
    %907 = vmatpush1.msra.mxu0 0.0
    %908 = vmatprep.subr.mxu0 0.0
    %909 = vmatpush1.msra.mxu0 0.0
    %910 = vmatprep.subr.mxu0 0.0
    %911 = vmatpush1.msra.mxu0 0.0
    %912 = vmatprep.subr.mxu0 0.0
    %913 = vmatpush1.msra.mxu0 0.0
    %914 = vmatprep.subr.mxu0 0.0
    %915 = vmatpush1.msra.mxu0 0.0
    %916 = vmatprep.subr.mxu0 0.0
    %917 = vmatpush1.msra.mxu0 0.0
    %918 = vmatprep.mubr.f32.mxu0 0.0
    %919 = vmatmul.mubr.f32.gmra.mrb[0].mxu0 %v852
    %v920 = vpop.f32.mrb[0].mxu0
    %v921 = vadd.f32 0.0, %v920
    %v922 = vpop.f32.mrb[0].mxu0
    %923 = vdwg.mxu0
    %v924 = vadd.f32 %v851, %v921
    %v925 = vxor.u32 %v924, 2147483648
    %v926 = vmul.f32 %v925, 1.442695
    %v927 = vpow.pop %v926
    %v928 = vadd.f32 %v927, 1.0
    %v929 = vrcp.pop %v928
    %v930 = vmul.f32 1.0, %v929
    %v931 = vtanh.pop %v924
    %v932 = vmul.f32 %v930, %v837
    %934 = vrot.lane.b32.xlu0 %v931, 64
    %v935 = vpop.permute.xlu0 %934
    %v937 = vmul.f32 %v930, %v935
    %939 = vrot.lane.b32.xlu0 %v937, 32
    %v940 = vpop.permute.xlu0 %939
    %v942 = vadd.f32 %v932, %v940
    %v943 = vtanh.pop %v942
    %945 = vrot.lane.b32.xlu0 %v943, 64
    %v946 = vpop.permute.xlu0 %945
    %v948 = vmul.f32 %v930, %v946
    %950 = vrot.lane.b32.xlu0 %v948, 32
    %v951 = vpop.permute.xlu0 %950
    %s953 = scalar_lea.vmem [#allocation3], 48
    %954 = vst.msk [vmem:[%s953] sm:$0xff] %vm73, %v951
    %s955 = scalar_lea.vmem [#allocation2], 56
    %v956 = vld [vmem:[%s955] sm:$0xff]
    %v957 = vsel %vm73, %v951, 0
    %959 = vmatprep.subr.mxu0 0.0
    %960 = vmatpush1.msra.mxu0 %v211
    %961 = vmatprep.subr.mxu0 0.0
    %962 = vmatpush1.msra.mxu0 %v212
    %963 = vmatprep.subr.mxu0 0.0
    %964 = vmatpush1.msra.mxu0 %v213
    %965 = vmatprep.subr.mxu0 0.0
    %966 = vmatpush1.msra.mxu0 %v214
    %967 = vmatprep.subr.mxu0 0.0
    %968 = vmatpush1.msra.mxu0 0.0
    %969 = vmatprep.subr.mxu0 0.0
    %970 = vmatpush1.msra.mxu0 0.0
    %971 = vmatprep.subr.mxu0 0.0
    %972 = vmatpush1.msra.mxu0 0.0
    %973 = vmatprep.subr.mxu0 0.0
    %974 = vmatpush1.msra.mxu0 0.0
    %975 = vmatprep.subr.mxu0 0.0
    %976 = vmatpush1.msra.mxu0 0.0
    %977 = vmatprep.subr.mxu0 0.0
    %978 = vmatpush1.msra.mxu0 0.0
    %979 = vmatprep.subr.mxu0 0.0
    %980 = vmatpush1.msra.mxu0 0.0
    %981 = vmatprep.subr.mxu0 0.0
    %982 = vmatpush1.msra.mxu0 0.0
    %983 = vmatprep.subr.mxu0 0.0
    %984 = vmatpush1.msra.mxu0 0.0
    %985 = vmatprep.subr.mxu0 0.0
    %986 = vmatpush1.msra.mxu0 0.0
    %987 = vmatprep.subr.mxu0 0.0
    %988 = vmatpush1.msra.mxu0 0.0
    %989 = vmatprep.subr.mxu0 0.0
    %990 = vmatpush1.msra.mxu0 0.0
    %991 = vmatprep.subr.mxu0 0.0
    %992 = vmatpush1.msra.mxu0 0.0
    %993 = vmatprep.subr.mxu0 0.0
    %994 = vmatpush1.msra.mxu0 0.0
    %995 = vmatprep.subr.mxu0 0.0
    %996 = vmatpush1.msra.mxu0 0.0
    %997 = vmatprep.subr.mxu0 0.0
    %998 = vmatpush1.msra.mxu0 0.0
    %999 = vmatprep.subr.mxu0 0.0
    %1000 = vmatpush1.msra.mxu0 0.0
    %1001 = vmatprep.subr.mxu0 0.0
    %1002 = vmatpush1.msra.mxu0 0.0
    %1003 = vmatprep.subr.mxu0 0.0
    %1004 = vmatpush1.msra.mxu0 0.0
    %1005 = vmatprep.subr.mxu0 0.0
    %1006 = vmatpush1.msra.mxu0 0.0
    %1007 = vmatprep.subr.mxu0 0.0
    %1008 = vmatpush1.msra.mxu0 0.0
    %1009 = vmatprep.subr.mxu0 0.0
    %1010 = vmatpush1.msra.mxu0 0.0
    %1011 = vmatprep.subr.mxu0 0.0
    %1012 = vmatpush1.msra.mxu0 0.0
    %1013 = vmatprep.subr.mxu0 0.0
    %1014 = vmatpush1.msra.mxu0 0.0
    %1015 = vmatprep.subr.mxu0 0.0
    %1016 = vmatpush1.msra.mxu0 0.0
    %1017 = vmatprep.subr.mxu0 0.0
    %1018 = vmatpush1.msra.mxu0 0.0
    %1019 = vmatprep.subr.mxu0 0.0
    %1020 = vmatpush1.msra.mxu0 0.0
    %1021 = vmatprep.subr.mxu0 0.0
    %1022 = vmatpush1.msra.mxu0 0.0
    %1023 = vmatprep.mubr.f32.mxu0 0.0
    %1024 = vmatmul.mubr.f32.gmra.mrb[0].mxu0 %v957
    %v1025 = vpop.f32.mrb[0].mxu0
    %v1026 = vadd.f32 0.0, %v1025
    %v1027 = vpop.f32.mrb[0].mxu0
    %1028 = vdwg.mxu0
    %v1029 = vadd.f32 %v956, %v1026
    %v1030 = vxor.u32 %v1029, 2147483648
    %v1031 = vmul.f32 %v1030, 1.442695
    %v1032 = vpow.pop %v1031
    %v1033 = vadd.f32 %v1032, 1.0
    %v1034 = vrcp.pop %v1033
    %v1035 = vmul.f32 1.0, %v1034
    %v1036 = vtanh.pop %v1029
    %v1037 = vmul.f32 %v1035, %v942
    %1039 = vrot.lane.b32.xlu0 %v1036, 64
    %v1040 = vpop.permute.xlu0 %1039
    %v1042 = vmul.f32 %v1035, %v1040
    %1044 = vrot.lane.b32.xlu0 %v1042, 32
    %v1045 = vpop.permute.xlu0 %1044
    %v1047 = vadd.f32 %v1037, %v1045
    %v1048 = vtanh.pop %v1047
    %1050 = vrot.lane.b32.xlu0 %v1048, 64
    %v1051 = vpop.permute.xlu0 %1050
    %v1053 = vmul.f32 %v1035, %v1051
    %1055 = vrot.lane.b32.xlu0 %v1053, 32
    %v1056 = vpop.permute.xlu0 %1055
    %s1058 = scalar_lea.vmem [#allocation3], 56
    %1059 = vst.msk [vmem:[%s1058] sm:$0xff] %vm73, %v1056
    %v1060 = vld [vmem:[#allocation3] sm:$0xff]
    %v1061 = vld [vmem:[#allocation3 + $0x8] sm:$0xff]
    %v1062 = vld [vmem:[#allocation3 + $0x10] sm:$0xff]
    %v1063 = vld [vmem:[#allocation3 + $0x18] sm:$0xff]
    %v1064 = vld [vmem:[#allocation3 + $0x20] sm:$0xff]
    %v1065 = vld [vmem:[#allocation3 + $0x28] sm:$0xff]
    %v1066 = vld [vmem:[#allocation3 + $0x30] sm:$0xff]
    %v1067 = vld [vmem:[#allocation3 + $0x38] sm:$0xff]
    %v1068 = vld [vmem:[%s6] sm:$0xff]
    %v1069 = vld [vmem:[%s6 + $0x8] sm:$0xff]
    %v1070 = vld [vmem:[%s6 + $0x10] sm:$0xff]
    %v1071 = vld [vmem:[%s6 + $0x18] sm:$0xff]
    %v1072 = vld [vmem:[%s7] sm:$0x1]
    %v1074 = vlaneseq
    %v1075 = vshrl.u32 %v1074, 7
    %v1076 = vsub.s32 0, %v1075
    %v1077 = vrot.slane %v1072, %v1076
    %v1080 = vsel %vm73, %v1060, 0
    %v1083 = vsel %vm73, %v1061, 0
    %v1086 = vsel %vm73, %v1062, 0
    %v1089 = vsel %vm73, %v1063, 0
    %v1092 = vsel %vm73, %v1064, 0
    %v1095 = vsel %vm73, %v1065, 0
    %v1098 = vsel %vm73, %v1066, 0
    %v1101 = vsel %vm73, %v1067, 0
    %1103 = vmatprep.subr.mxu0 0.0
    %1104 = vmatpush1.msra.mxu0 %v1068
    %1105 = vmatprep.subr.mxu0 0.0
    %1106 = vmatpush1.msra.mxu0 %v1069
    %1107 = vmatprep.subr.mxu0 0.0
    %1108 = vmatpush1.msra.mxu0 %v1070
    %1109 = vmatprep.subr.mxu0 0.0
    %1110 = vmatpush1.msra.mxu0 %v1071
    %1111 = vmatprep.subr.mxu0 0.0
    %1112 = vmatpush1.msra.mxu0 0.0
    %1113 = vmatprep.subr.mxu0 0.0
    %1114 = vmatpush1.msra.mxu0 0.0
    %1115 = vmatprep.subr.mxu0 0.0
    %1116 = vmatpush1.msra.mxu0 0.0
    %1117 = vmatprep.subr.mxu0 0.0
    %1118 = vmatpush1.msra.mxu0 0.0
    %1119 = vmatprep.subr.mxu0 0.0
    %1120 = vmatpush1.msra.mxu0 0.0
    %1121 = vmatprep.subr.mxu0 0.0
    %1122 = vmatpush1.msra.mxu0 0.0
    %1123 = vmatprep.subr.mxu0 0.0
    %1124 = vmatpush1.msra.mxu0 0.0
    %1125 = vmatprep.subr.mxu0 0.0
    %1126 = vmatpush1.msra.mxu0 0.0
    %1127 = vmatprep.subr.mxu0 0.0
    %1128 = vmatpush1.msra.mxu0 0.0
    %1129 = vmatprep.subr.mxu0 0.0
    %1130 = vmatpush1.msra.mxu0 0.0
    %1131 = vmatprep.subr.mxu0 0.0
    %1132 = vmatpush1.msra.mxu0 0.0
    %1133 = vmatprep.subr.mxu0 0.0
    %1134 = vmatpush1.msra.mxu0 0.0
    %1135 = vmatprep.subr.mxu0 0.0
    %1136 = vmatpush1.msra.mxu0 0.0
    %1137 = vmatprep.subr.mxu0 0.0
    %1138 = vmatpush1.msra.mxu0 0.0
    %1139 = vmatprep.subr.mxu0 0.0
    %1140 = vmatpush1.msra.mxu0 0.0
    %1141 = vmatprep.subr.mxu0 0.0
    %1142 = vmatpush1.msra.mxu0 0.0
    %1143 = vmatprep.subr.mxu0 0.0
    %1144 = vmatpush1.msra.mxu0 0.0
    %1145 = vmatprep.subr.mxu0 0.0
    %1146 = vmatpush1.msra.mxu0 0.0
    %1147 = vmatprep.subr.mxu0 0.0
    %1148 = vmatpush1.msra.mxu0 0.0
    %1149 = vmatprep.subr.mxu0 0.0
    %1150 = vmatpush1.msra.mxu0 0.0
    %1151 = vmatprep.subr.mxu0 0.0
    %1152 = vmatpush1.msra.mxu0 0.0
    %1153 = vmatprep.subr.mxu0 0.0
    %1154 = vmatpush1.msra.mxu0 0.0
    %1155 = vmatprep.subr.mxu0 0.0
    %1156 = vmatpush1.msra.mxu0 0.0
    %1157 = vmatprep.subr.mxu0 0.0
    %1158 = vmatpush1.msra.mxu0 0.0
    %1159 = vmatprep.subr.mxu0 0.0
    %1160 = vmatpush1.msra.mxu0 0.0
    %1161 = vmatprep.subr.mxu0 0.0
    %1162 = vmatpush1.msra.mxu0 0.0
    %1163 = vmatprep.subr.mxu0 0.0
    %1164 = vmatpush1.msra.mxu0 0.0
    %1165 = vmatprep.subr.mxu0 0.0
    %1166 = vmatpush1.msra.mxu0 0.0
    %1167 = vmatprep.mubr.f32.mxu0 0.0
    %1168 = vmatmul.mubr.f32.gmra.mrb[0].mxu0 %v1080
    %v1169 = vpop.f32.mrb[0].mxu0
    %v1170 = vadd.f32 %v1077, %v1169
    %v1171 = vpop.f32.mrb[0].mxu0
    %1172 = vmatprep.mubr.f32.mxu0 0.0
    %1173 = vmatmul.mubr.f32.gmra.mrb[0].mxu0 %v1083
    %v1174 = vpop.f32.mrb[0].mxu0
    %v1175 = vadd.f32 %v1077, %v1174
    %v1176 = vpop.f32.mrb[0].mxu0
    %1177 = vmatprep.mubr.f32.mxu0 0.0
    %1178 = vmatmul.mubr.f32.gmra.mrb[0].mxu0 %v1086
    %v1179 = vpop.f32.mrb[0].mxu0
    %v1180 = vadd.f32 %v1077, %v1179
    %v1181 = vpop.f32.mrb[0].mxu0
    %1182 = vmatprep.mubr.f32.mxu0 0.0
    %1183 = vmatmul.mubr.f32.gmra.mrb[0].mxu0 %v1089
    %v1184 = vpop.f32.mrb[0].mxu0
    %v1185 = vadd.f32 %v1077, %v1184
    %v1186 = vpop.f32.mrb[0].mxu0
    %1187 = vmatprep.mubr.f32.mxu0 0.0
    %1188 = vmatmul.mubr.f32.gmra.mrb[0].mxu0 %v1092
    %v1189 = vpop.f32.mrb[0].mxu0
    %v1190 = vadd.f32 %v1077, %v1189
    %v1191 = vpop.f32.mrb[0].mxu0
    %1192 = vmatprep.mubr.f32.mxu0 0.0
    %1193 = vmatmul.mubr.f32.gmra.mrb[0].mxu0 %v1095
    %v1194 = vpop.f32.mrb[0].mxu0
    %v1195 = vadd.f32 %v1077, %v1194
    %v1196 = vpop.f32.mrb[0].mxu0
    %1197 = vmatprep.mubr.f32.mxu0 0.0
    %1198 = vmatmul.mubr.f32.gmra.mrb[0].mxu0 %v1098
    %v1199 = vpop.f32.mrb[0].mxu0
    %v1200 = vadd.f32 %v1077, %v1199
    %v1201 = vpop.f32.mrb[0].mxu0
    %1202 = vmatprep.mubr.f32.mxu0 0.0
    %1203 = vmatmul.mubr.f32.gmra.mrb[0].mxu0 %v1101
    %v1204 = vpop.f32.mrb[0].mxu0
    %v1205 = vadd.f32 %v1077, %v1204
    %v1206 = vpop.f32.mrb[0].mxu0
    %1207 = vdwg.mxu0
    %1208 = vst [vmem:[#allocation9] sm:$0xff] %v1170
    %1209 = vst [vmem:[#allocation9 + $0x8] sm:$0xff] %v1175
    %1210 = vst [vmem:[#allocation9 + $0x10] sm:$0xff] %v1180
    %1211 = vst [vmem:[#allocation9 + $0x18] sm:$0xff] %v1185
    %1212 = vst [vmem:[#allocation9 + $0x20] sm:$0xff] %v1190
    %1213 = vst [vmem:[#allocation9 + $0x28] sm:$0xff] %v1195
    %1214 = vst [vmem:[#allocation9 + $0x30] sm:$0xff] %v1200
    %1215 = vst [vmem:[#allocation9 + $0x38] sm:$0xff] %v1205
    // Predicated region
    $region42: #{tpu_custom_call.1} parent=1 // pred_check
      _
    $region43: #{tpu_custom_call.1} parent=1 // pred_check_branch
      %1217 = sbr.rel (0) target = $region45
    $region44: #{tpu_custom_call.1} parent=1 // pred_region
      %s1219 = ssub.s32 1024, 1024
      %1220 = vsyncadd [#allocation6], %s1219
      %s1221 = sshll.u32 [#allocation9], 4
      %s1222 = int_to_ptr.vmem [resolvable:$true] %s1221
      %1227 = dma.vmem_to_hbm [thread:$0]  %s1222, 1024, %s8, [#allocation6], 128, 128, 8
    $region45: #{tpu_custom_call.1} parent=1 // pred_fallthru
      _
    // Predicated region
    $region46: #{tpu_custom_call.1} parent=1 // pred_check
      _
    $region47: #{tpu_custom_call.1} parent=1 // pred_check_branch
      %1229 = sbr.rel (0) target = $region49
    $region48: #{tpu_custom_call.1} parent=1 // pred_region
      %1230 = dma.done [#allocation6], 1024
    $region49: #{tpu_custom_call.1} parent=1 // pred_fallthru
      _
    %1231 = vsyncpa [#allocation5], 1
    %1232 = vsyncpa [#allocation8], 1
    %1233 = vsyncpa [#allocation6], 1

</llo_original>
